<compile_context>
chip_gen: v6e
topology: v6e:2x2x1
jax: 0.10.0
libtpu: 0.0.40
codegen_flags: <defaults>
</compile_context>

<pallas_src>
import functools

import jax
import jax.numpy as jnp
from jax import lax
from jax.experimental import pallas as pl
from jax.experimental.pallas import tpu as pltpu


def _sdpa_kernel(x_ref, wqkv_ref, wout_ref, o_ref, *, B, L, H, A):
    # x_ref:    (B*L, E)   embeddings, native compute dtype (f32 or bf16)
    # wqkv_ref: (E, 3E)    prepared QKV weight; columns = [Q(all heads)|K|V],
    #                      head h occupies lanes [h*A, (h+1)*A) inside each block,
    #                      Q columns pre-scaled by 1/sqrt(A)
    # wout_ref: (E, E)     prepared output weight, (E_in, E_out) lane-dense
    # o_ref:    (B*L, E)
    E = H * A
    dn = (((1,), (1,)), ((), ()))            # contract last dims: a @ b.T for 2-D

    x = x_ref[...]                            # native dtype feeds the MXU directly
    cdt = x.dtype                             # compute dtype for MXU operands

    # ---- 1. fused QKV projection: one matmul, N = 3E ---------------------------
    qkv = jnp.dot(x, wqkv_ref[...], preferred_element_type=jnp.float32)  # (B*L, 3E)
    qkv_c = qkv.astype(cdt)                   # keep MXU operands in compute dtype
    q = qkv_c[:, :E]                          # (B*L, E), head h in lanes h*A..(h+1)*A
    k = qkv_c[:, E:2 * E]
    v = qkv_c[:, 2 * E:]

    # ---- 2. per-(b,h) 8x8 score blocks, stacked along sublanes -----------------
    # Scale is folded into the Q weights; a uniform scalar attn_bias is a softmax
    # no-op (cancelled by the row-max subtraction), so it is not added here.
    # TODO(synk): boolean attn_mask (masked_fill) / tensor attn_bias not wired;
    # the module's default call path uses attn_mask=None and scalar attn_bias=0.
    s_blocks = []
    for b in range(B):                        # static unroll over the tiny batch
        for h in range(H):
            qb = q[b * L:(b + 1) * L, h * A:(h + 1) * A]    # (L, A)
            kb = k[b * L:(b + 1) * L, h * A:(h + 1) * A]    # (L, A)
            s_blocks.append(
                lax.dot_general(qb, kb, dn, preferred_element_type=jnp.float32))
    s_all = jnp.concatenate(s_blocks, axis=0)               # (B*H*L, L) f32

    # ---- 3. one batched softmax over all (b, h) pairs ---------------------------
    s_all = s_all - jnp.max(s_all, axis=-1, keepdims=True)
    p_all = jnp.exp(s_all)
    p_all = p_all * pl.reciprocal(jnp.sum(p_all, axis=-1, keepdims=True),
                                  approx=True)              # EUP vrcp
    p_all = p_all.astype(cdt)

    # ---- 4. per-(b,h) attention values, lane-concatenated back to (B*L, E) -----
    rows = []
    for b in range(B):
        cols = []
        for h in range(H):
            r0 = (b * H + h) * L
            pb = p_all[r0:r0 + L, :]                         # (L, L)
            vb = v[b * L:(b + 1) * L, h * A:(h + 1) * A]     # (L, A)
            cols.append(jnp.dot(pb, vb, preferred_element_type=jnp.float32))
        rows.append(jnp.concatenate(cols, axis=-1))          # (L, E)
    pv = jnp.concatenate(rows, axis=0).astype(cdt)           # (B*L, E)

    # ---- 5. fused output projection + single full-tile store -------------------
    out = jnp.dot(pv, wout_ref[...], preferred_element_type=jnp.float32)  # (B*L, E)
    o_ref[...] = out.astype(o_ref.dtype)


def prepare_sdpa_weights(w_qkv, w_out, *, H, scale, dtype=None):
    """One-time (init) weight layout prep — hoisted out of the per-call path.

    w_qkv: (3E, E) torch layout (rows = h*3A + t*A + a, t in {q,k,v})
           -> (E, 3E) lane-dense, columns ordered [Q | K | V] with per-head
              A-wide blocks inside each, Q columns pre-scaled by 1/sqrt(A).
    w_out: (E_out, E_in) torch layout -> (E_in, E_out) lane-dense.
    dtype: optional cast (e.g. jnp.bfloat16 for the native MXU path).
    """
    _, E = w_qkv.shape
    A = E // H
    w = w_qkv.reshape(H, 3, A, E)                            # [h, t, a, e]
    w = w * jnp.asarray([scale, 1.0, 1.0], w.dtype).reshape(1, 3, 1, 1)
    w = w.transpose(1, 0, 2, 3).reshape(3 * E, E)            # rows ordered [t, h, a]
    wqkv_prep = w.T                                          # (E, 3E)
    wout_prep = w_out.T                                      # (E_in, E_out)
    if dtype is not None:
        wqkv_prep = wqkv_prep.astype(dtype)
        wout_prep = wout_prep.astype(dtype)
    return wqkv_prep, wout_prep


def sdpa_operator(embeddings, wqkv_prep, wout_prep, *, H, attn_bias=0.0):
    """embeddings: (B, L, E); weights pre-processed by prepare_sdpa_weights.

    attn_bias must be a scalar; a uniform scalar bias does not change softmax
    output, so it is not materialized in the kernel (bit-identical result).
    """
    del attn_bias  # scalar bias is a softmax no-op; TODO(synk): tensor bias/mask.
    B, L, E = embeddings.shape
    assert E % H == 0
    A = E // H

    x2d = embeddings.reshape(B * L, E)        # free reshape; M = B*L rows
    kernel = functools.partial(_sdpa_kernel, B=B, L=L, H=H, A=A)

    out2d = pl.pallas_call(
        kernel,
        out_shape=jax.ShapeDtypeStruct((B * L, E), embeddings.dtype),
        grid=(1,),                            # single step: shapes are tiny, avoid
        in_specs=[                            # per-step pipeline overhead
            pl.BlockSpec((B * L, E), lambda i: (0, 0)),
            pl.BlockSpec((E, 3 * E), lambda i: (0, 0)),
            pl.BlockSpec((E, E), lambda i: (0, 0)),
        ],
        out_specs=pl.BlockSpec((B * L, E), lambda i: (0, 0)),
        compiler_params=pltpu.CompilerParams(
            dimension_semantics=("arbitrary",)),
    )(x2d, wqkv_prep, wout_prep)
    return out2d.reshape(B, L, E)


def _reference(embeddings, w_qkv, w_out, *, H, attn_bias=0.0):
    """Pure-JAX replica of the PyTorch forward, for a numerical sanity check."""
    B, L, E = embeddings.shape
    A = E // H
    scale = float(A) ** (-0.5)
    qkv = embeddings @ w_qkv.T                               # (B, L, 3E)
    qkv = qkv.reshape(B, L, H, 3 * A).transpose(0, 2, 1, 3)
    q, k, v = jnp.split(qkv, 3, axis=-1)                     # each (B, H, L, A)
    attn = jnp.einsum("bhqa,bhka->bhqk", q, k) * scale + attn_bias
    attn = jax.nn.softmax(attn, axis=-1)
    vals = jnp.einsum("bhqk,bhka->bhqa", attn, v)
    vals = vals.transpose(0, 2, 1, 3).reshape(B, L, E)
    return vals @ w_out.T


if __name__ == "__main__":
    # Small shapes consistent with the module: B=2, L=8 (seq), E=32 (embed), H=4 heads.
    B, L, E, H = 2, 8, 32, 4
    A = E // H
    scale = float(A) ** (-0.5)

    key = jax.random.PRNGKey(0)
    k_x, k_qkv, k_out = jax.random.split(key, 3)

    x = jax.random.normal(k_x, (B, L, E), dtype=jnp.float32)
    # Torch-layout Linear weights: (out_features, in_features).
    w_qkv = jax.random.normal(k_qkv, (3 * E, E), dtype=jnp.float32) * (E ** -0.5)
    w_out = jax.random.normal(k_out, (E, E), dtype=jnp.float32) * (E ** -0.5)

    ref = _reference(x, w_qkv, w_out, H=H, attn_bias=0.0)

    # ---- f32 path (module's native dtype); approx reciprocal -> slightly loose tol.
    wqkv_prep, wout_prep = prepare_sdpa_weights(w_qkv, w_out, H=H, scale=scale)
    out = jax.block_until_ready(sdpa_operator(x, wqkv_prep, wout_prep, H=H))
    assert out.shape == (B, L, E)
    assert jnp.allclose(out, ref, atol=2e-2, rtol=2e-2), "f32 mismatch vs reference"

    # ---- bf16-operand path (native MXU dtype on v5e/v6e/v7x); softmax stays f32.
    wqkv_bf, wout_bf = prepare_sdpa_weights(w_qkv, w_out, H=H, scale=scale,
                                            dtype=jnp.bfloat16)
    out_bf = jax.block_until_ready(
        sdpa_operator(x.astype(jnp.bfloat16), wqkv_bf, wout_bf, H=H))
    assert out_bf.shape == (B, L, E)
    assert jnp.allclose(out_bf.astype(jnp.float32), ref, atol=1e-1, rtol=1e-1), \
        "bf16 mismatch vs reference"

    print("KERNEL_OK")
</pallas_src>

<mosaic_0001>
module attributes {stable_mosaic.version = 11 : i64} {
  func.func @_sdpa_kernel(%arg0: i32, %arg1: memref<16x32xf32, #tpu.memory_space<vmem>>, %arg2: memref<32x96xf32, #tpu.memory_space<vmem>>, %arg3: memref<32x32xf32, #tpu.memory_space<vmem>>, %arg4: memref<16x32xf32, #tpu.memory_space<vmem>>) attributes {dimension_semantics = [#tpu.dimension_semantics<arbitrary>], iteration_bounds = array<i64: 1>, scalar_prefetch = 0 : i64, scratch_operands = 0 : i64, tpu.core_type = #tpu.core_type<tc>, window_params = [{pipeline_mode = #tpu.pipeline_mode<synchronous>, transform_indices = @transform_0, window_bounds = array<i64: 16, 32>}, {pipeline_mode = #tpu.pipeline_mode<synchronous>, transform_indices = @transform_1, window_bounds = array<i64: 32, 96>}, {pipeline_mode = #tpu.pipeline_mode<synchronous>, transform_indices = @transform_2, window_bounds = array<i64: 32, 32>}, {pipeline_mode = #tpu.pipeline_mode<synchronous>, transform_indices = @transform_3, window_bounds = array<i64: 16, 32>}]} {
    %c0 = arith.constant 0 : index
    %c0_0 = arith.constant 0 : index
    %0 = vector.load %arg1[%c0, %c0_0] : memref<16x32xf32, #tpu.memory_space<vmem>>, vector<16x32xf32>
    %c0_1 = arith.constant 0 : index
    %c0_2 = arith.constant 0 : index
    %1 = vector.load %arg2[%c0_1, %c0_2] : memref<32x96xf32, #tpu.memory_space<vmem>>, vector<32x96xf32>
    %cst = arith.constant dense<0.000000e+00> : vector<16x96xf32>
    %2 = tpu.matmul %0, %1, %cst {dimension_numbers = #tpu.dot_dimension_numbers<[1], [0], [0], [1], [0, 0, 1, 1], [], []>} : vector<16x32xf32>, vector<32x96xf32>, vector<16x96xf32> -> vector<16x96xf32>
    %3 = vector.extract_strided_slice %2 {offsets = [0, 0], sizes = [16, 32], strides = [1, 1]} : vector<16x96xf32> to vector<16x32xf32>
    %4 = vector.extract_strided_slice %2 {offsets = [0, 32], sizes = [16, 32], strides = [1, 1]} : vector<16x96xf32> to vector<16x32xf32>
    %5 = vector.extract_strided_slice %2 {offsets = [0, 64], sizes = [16, 32], strides = [1, 1]} : vector<16x96xf32> to vector<16x32xf32>
    %6 = vector.extract_strided_slice %3 {offsets = [0, 0], sizes = [8, 8], strides = [1, 1]} : vector<16x32xf32> to vector<8x8xf32>
    %7 = vector.extract_strided_slice %4 {offsets = [0, 0], sizes = [8, 8], strides = [1, 1]} : vector<16x32xf32> to vector<8x8xf32>
    %cst_3 = arith.constant dense<0.000000e+00> : vector<8x8xf32>
    %8 = tpu.matmul %6, %7, %cst_3 {dimension_numbers = #tpu.dot_dimension_numbers<[1], [1], [0], [0], [0, 0, 1, 0], [], []>} : vector<8x8xf32>, vector<8x8xf32>, vector<8x8xf32> -> vector<8x8xf32>
    %9 = vector.extract_strided_slice %3 {offsets = [0, 8], sizes = [8, 8], strides = [1, 1]} : vector<16x32xf32> to vector<8x8xf32>
    %10 = vector.extract_strided_slice %4 {offsets = [0, 8], sizes = [8, 8], strides = [1, 1]} : vector<16x32xf32> to vector<8x8xf32>
    %cst_4 = arith.constant dense<0.000000e+00> : vector<8x8xf32>
    %11 = tpu.matmul %9, %10, %cst_4 {dimension_numbers = #tpu.dot_dimension_numbers<[1], [1], [0], [0], [0, 0, 1, 0], [], []>} : vector<8x8xf32>, vector<8x8xf32>, vector<8x8xf32> -> vector<8x8xf32>
    %12 = vector.extract_strided_slice %3 {offsets = [0, 16], sizes = [8, 8], strides = [1, 1]} : vector<16x32xf32> to vector<8x8xf32>
    %13 = vector.extract_strided_slice %4 {offsets = [0, 16], sizes = [8, 8], strides = [1, 1]} : vector<16x32xf32> to vector<8x8xf32>
    %cst_5 = arith.constant dense<0.000000e+00> : vector<8x8xf32>
    %14 = tpu.matmul %12, %13, %cst_5 {dimension_numbers = #tpu.dot_dimension_numbers<[1], [1], [0], [0], [0, 0, 1, 0], [], []>} : vector<8x8xf32>, vector<8x8xf32>, vector<8x8xf32> -> vector<8x8xf32>
    %15 = vector.extract_strided_slice %3 {offsets = [0, 24], sizes = [8, 8], strides = [1, 1]} : vector<16x32xf32> to vector<8x8xf32>
    %16 = vector.extract_strided_slice %4 {offsets = [0, 24], sizes = [8, 8], strides = [1, 1]} : vector<16x32xf32> to vector<8x8xf32>
    %cst_6 = arith.constant dense<0.000000e+00> : vector<8x8xf32>
    %17 = tpu.matmul %15, %16, %cst_6 {dimension_numbers = #tpu.dot_dimension_numbers<[1], [1], [0], [0], [0, 0, 1, 0], [], []>} : vector<8x8xf32>, vector<8x8xf32>, vector<8x8xf32> -> vector<8x8xf32>
    %18 = vector.extract_strided_slice %3 {offsets = [8, 0], sizes = [8, 8], strides = [1, 1]} : vector<16x32xf32> to vector<8x8xf32>
    %19 = vector.extract_strided_slice %4 {offsets = [8, 0], sizes = [8, 8], strides = [1, 1]} : vector<16x32xf32> to vector<8x8xf32>
    %cst_7 = arith.constant dense<0.000000e+00> : vector<8x8xf32>
    %20 = tpu.matmul %18, %19, %cst_7 {dimension_numbers = #tpu.dot_dimension_numbers<[1], [1], [0], [0], [0, 0, 1, 0], [], []>} : vector<8x8xf32>, vector<8x8xf32>, vector<8x8xf32> -> vector<8x8xf32>
    %21 = vector.extract_strided_slice %3 {offsets = [8, 8], sizes = [8, 8], strides = [1, 1]} : vector<16x32xf32> to vector<8x8xf32>
    %22 = vector.extract_strided_slice %4 {offsets = [8, 8], sizes = [8, 8], strides = [1, 1]} : vector<16x32xf32> to vector<8x8xf32>
    %cst_8 = arith.constant dense<0.000000e+00> : vector<8x8xf32>
    %23 = tpu.matmul %21, %22, %cst_8 {dimension_numbers = #tpu.dot_dimension_numbers<[1], [1], [0], [0], [0, 0, 1, 0], [], []>} : vector<8x8xf32>, vector<8x8xf32>, vector<8x8xf32> -> vector<8x8xf32>
    %24 = vector.extract_strided_slice %3 {offsets = [8, 16], sizes = [8, 8], strides = [1, 1]} : vector<16x32xf32> to vector<8x8xf32>
    %25 = vector.extract_strided_slice %4 {offsets = [8, 16], sizes = [8, 8], strides = [1, 1]} : vector<16x32xf32> to vector<8x8xf32>
    %cst_9 = arith.constant dense<0.000000e+00> : vector<8x8xf32>
    %26 = tpu.matmul %24, %25, %cst_9 {dimension_numbers = #tpu.dot_dimension_numbers<[1], [1], [0], [0], [0, 0, 1, 0], [], []>} : vector<8x8xf32>, vector<8x8xf32>, vector<8x8xf32> -> vector<8x8xf32>
    %27 = vector.extract_strided_slice %3 {offsets = [8, 24], sizes = [8, 8], strides = [1, 1]} : vector<16x32xf32> to vector<8x8xf32>
    %28 = vector.extract_strided_slice %4 {offsets = [8, 24], sizes = [8, 8], strides = [1, 1]} : vector<16x32xf32> to vector<8x8xf32>
    %cst_10 = arith.constant dense<0.000000e+00> : vector<8x8xf32>
    %29 = tpu.matmul %27, %28, %cst_10 {dimension_numbers = #tpu.dot_dimension_numbers<[1], [1], [0], [0], [0, 0, 1, 0], [], []>} : vector<8x8xf32>, vector<8x8xf32>, vector<8x8xf32> -> vector<8x8xf32>
    %30 = tpu.concatenate %8, %11, %14, %17, %20, %23, %26, %29 in 0 : vector<8x8xf32>, vector<8x8xf32>, vector<8x8xf32>, vector<8x8xf32>, vector<8x8xf32>, vector<8x8xf32>, vector<8x8xf32>, vector<8x8xf32> -> vector<64x8xf32>
    %cst_11 = arith.constant dense<0xFF800000> : vector<64xf32>
    %31 = vector.multi_reduction <maximumf>, %30, %cst_11 [1] : vector<64x8xf32> to vector<64xf32>
    %32 = vector.shape_cast %31 : vector<64xf32> to vector<64x1xf32>
    %33 = vector.broadcast %32 : vector<64x1xf32> to vector<64x8xf32>
    %34 = arith.subf %30, %33 : vector<64x8xf32>
    %35 = math.exp %34 : vector<64x8xf32>
    %cst_12 = arith.constant dense<0.000000e+00> : vector<64xf32>
    %36 = vector.multi_reduction <add>, %35, %cst_12 [1] : vector<64x8xf32> to vector<64xf32>
    %37 = vector.shape_cast %36 : vector<64xf32> to vector<64x1xf32>
    %38 = tpu.reciprocal %37 {approx = true} : vector<64x1xf32> -> vector<64x1xf32>
    %39 = vector.broadcast %38 : vector<64x1xf32> to vector<64x8xf32>
    %40 = arith.mulf %35, %39 : vector<64x8xf32>
    %41 = vector.extract_strided_slice %40 {offsets = [0, 0], sizes = [8, 8], strides = [1, 1]} : vector<64x8xf32> to vector<8x8xf32>
    %42 = vector.extract_strided_slice %5 {offsets = [0, 0], sizes = [8, 8], strides = [1, 1]} : vector<16x32xf32> to vector<8x8xf32>
    %cst_13 = arith.constant dense<0.000000e+00> : vector<8x8xf32>
    %43 = tpu.matmul %41, %42, %cst_13 {dimension_numbers = #tpu.dot_dimension_numbers<[1], [0], [0], [1], [0, 0, 1, 1], [], []>} : vector<8x8xf32>, vector<8x8xf32>, vector<8x8xf32> -> vector<8x8xf32>
    %44 = vector.extract_strided_slice %40 {offsets = [8, 0], sizes = [8, 8], strides = [1, 1]} : vector<64x8xf32> to vector<8x8xf32>
    %45 = vector.extract_strided_slice %5 {offsets = [0, 8], sizes = [8, 8], strides = [1, 1]} : vector<16x32xf32> to vector<8x8xf32>
    %cst_14 = arith.constant dense<0.000000e+00> : vector<8x8xf32>
    %46 = tpu.matmul %44, %45, %cst_14 {dimension_numbers = #tpu.dot_dimension_numbers<[1], [0], [0], [1], [0, 0, 1, 1], [], []>} : vector<8x8xf32>, vector<8x8xf32>, vector<8x8xf32> -> vector<8x8xf32>
    %47 = vector.extract_strided_slice %40 {offsets = [16, 0], sizes = [8, 8], strides = [1, 1]} : vector<64x8xf32> to vector<8x8xf32>
    %48 = vector.extract_strided_slice %5 {offsets = [0, 16], sizes = [8, 8], strides = [1, 1]} : vector<16x32xf32> to vector<8x8xf32>
    %cst_15 = arith.constant dense<0.000000e+00> : vector<8x8xf32>
    %49 = tpu.matmul %47, %48, %cst_15 {dimension_numbers = #tpu.dot_dimension_numbers<[1], [0], [0], [1], [0, 0, 1, 1], [], []>} : vector<8x8xf32>, vector<8x8xf32>, vector<8x8xf32> -> vector<8x8xf32>
    %50 = vector.extract_strided_slice %40 {offsets = [24, 0], sizes = [8, 8], strides = [1, 1]} : vector<64x8xf32> to vector<8x8xf32>
    %51 = vector.extract_strided_slice %5 {offsets = [0, 24], sizes = [8, 8], strides = [1, 1]} : vector<16x32xf32> to vector<8x8xf32>
    %cst_16 = arith.constant dense<0.000000e+00> : vector<8x8xf32>
    %52 = tpu.matmul %50, %51, %cst_16 {dimension_numbers = #tpu.dot_dimension_numbers<[1], [0], [0], [1], [0, 0, 1, 1], [], []>} : vector<8x8xf32>, vector<8x8xf32>, vector<8x8xf32> -> vector<8x8xf32>
    %53 = tpu.concatenate %43, %46, %49, %52 in 1 : vector<8x8xf32>, vector<8x8xf32>, vector<8x8xf32>, vector<8x8xf32> -> vector<8x32xf32>
    %54 = vector.extract_strided_slice %40 {offsets = [32, 0], sizes = [8, 8], strides = [1, 1]} : vector<64x8xf32> to vector<8x8xf32>
    %55 = vector.extract_strided_slice %5 {offsets = [8, 0], sizes = [8, 8], strides = [1, 1]} : vector<16x32xf32> to vector<8x8xf32>
    %cst_17 = arith.constant dense<0.000000e+00> : vector<8x8xf32>
    %56 = tpu.matmul %54, %55, %cst_17 {dimension_numbers = #tpu.dot_dimension_numbers<[1], [0], [0], [1], [0, 0, 1, 1], [], []>} : vector<8x8xf32>, vector<8x8xf32>, vector<8x8xf32> -> vector<8x8xf32>
    %57 = vector.extract_strided_slice %40 {offsets = [40, 0], sizes = [8, 8], strides = [1, 1]} : vector<64x8xf32> to vector<8x8xf32>
    %58 = vector.extract_strided_slice %5 {offsets = [8, 8], sizes = [8, 8], strides = [1, 1]} : vector<16x32xf32> to vector<8x8xf32>
    %cst_18 = arith.constant dense<0.000000e+00> : vector<8x8xf32>
    %59 = tpu.matmul %57, %58, %cst_18 {dimension_numbers = #tpu.dot_dimension_numbers<[1], [0], [0], [1], [0, 0, 1, 1], [], []>} : vector<8x8xf32>, vector<8x8xf32>, vector<8x8xf32> -> vector<8x8xf32>
    %60 = vector.extract_strided_slice %40 {offsets = [48, 0], sizes = [8, 8], strides = [1, 1]} : vector<64x8xf32> to vector<8x8xf32>
    %61 = vector.extract_strided_slice %5 {offsets = [8, 16], sizes = [8, 8], strides = [1, 1]} : vector<16x32xf32> to vector<8x8xf32>
    %cst_19 = arith.constant dense<0.000000e+00> : vector<8x8xf32>
    %62 = tpu.matmul %60, %61, %cst_19 {dimension_numbers = #tpu.dot_dimension_numbers<[1], [0], [0], [1], [0, 0, 1, 1], [], []>} : vector<8x8xf32>, vector<8x8xf32>, vector<8x8xf32> -> vector<8x8xf32>
    %63 = vector.extract_strided_slice %40 {offsets = [56, 0], sizes = [8, 8], strides = [1, 1]} : vector<64x8xf32> to vector<8x8xf32>
    %64 = vector.extract_strided_slice %5 {offsets = [8, 24], sizes = [8, 8], strides = [1, 1]} : vector<16x32xf32> to vector<8x8xf32>
    %cst_20 = arith.constant dense<0.000000e+00> : vector<8x8xf32>
    %65 = tpu.matmul %63, %64, %cst_20 {dimension_numbers = #tpu.dot_dimension_numbers<[1], [0], [0], [1], [0, 0, 1, 1], [], []>} : vector<8x8xf32>, vector<8x8xf32>, vector<8x8xf32> -> vector<8x8xf32>
    %66 = tpu.concatenate %56, %59, %62, %65 in 1 : vector<8x8xf32>, vector<8x8xf32>, vector<8x8xf32>, vector<8x8xf32> -> vector<8x32xf32>
    %67 = tpu.concatenate %53, %66 in 0 : vector<8x32xf32>, vector<8x32xf32> -> vector<16x32xf32>
    %c0_21 = arith.constant 0 : index
    %c0_22 = arith.constant 0 : index
    %68 = vector.load %arg3[%c0_21, %c0_22] : memref<32x32xf32, #tpu.memory_space<vmem>>, vector<32x32xf32>
    %cst_23 = arith.constant dense<0.000000e+00> : vector<16x32xf32>
    %69 = tpu.matmul %67, %68, %cst_23 {dimension_numbers = #tpu.dot_dimension_numbers<[1], [0], [0], [1], [0, 0, 1, 1], [], []>} : vector<16x32xf32>, vector<32x32xf32>, vector<16x32xf32> -> vector<16x32xf32>
    %c0_24 = arith.constant 0 : index
    %c0_25 = arith.constant 0 : index
    %70 = vector.load %arg4[%c0_24, %c0_25] : memref<16x32xf32, #tpu.memory_space<vmem>>, vector<16x32xf32>
    tpu.vector_store %arg4[%c0_24, %c0_25], %69 {strides = array<i32>} : memref<16x32xf32, #tpu.memory_space<vmem>>, vector<16x32xf32>,
    return
  }
  func.func @transform_0(%arg0: i32) -> (i32, i32) {
    %c0_i32 = arith.constant 0 : i32
    %c0_i32_0 = arith.constant 0 : i32
    %c0_i32_1 = arith.constant 0 : i32
    return %c0_i32, %c0_i32_0 : i32, i32
  }
  func.func @transform_1(%arg0: i32) -> (i32, i32) {
    %c0_i32 = arith.constant 0 : i32
    %c0_i32_0 = arith.constant 0 : i32
    %c0_i32_1 = arith.constant 0 : i32
    return %c0_i32, %c0_i32_0 : i32, i32
  }
  func.func @transform_2(%arg0: i32) -> (i32, i32) {
    %c0_i32 = arith.constant 0 : i32
    %c0_i32_0 = arith.constant 0 : i32
    %c0_i32_1 = arith.constant 0 : i32
    return %c0_i32, %c0_i32_0 : i32, i32
  }
  func.func @transform_3(%arg0: i32) -> (i32, i32) {
    %c0_i32 = arith.constant 0 : i32
    %c0_i32_0 = arith.constant 0 : i32
    %c0_i32_1 = arith.constant 0 : i32
    return %c0_i32, %c0_i32_0 : i32, i32
  }
}

</mosaic_0001>

<llo_original>
// kernel: tpu_custom_call.1
$region0: #{tpu_custom_call.1}
  #allocation0 [shape = 'u32[]', space=smem, size = 0x4, offset = 0x4, fixed_abs, tag = 'smem constant byte address 0x4 - core index']
  #allocation1 [shape = 'u32[144,128]{1,0:T(1,128)}', space=vmem, size = 0x12000, scoped, tag = 'internal scratch']
  %s0 = inlined_call_operand.hbm [shape: f32[16,32], index: 0, kind: input, shape index: {}]
  %s1 = inlined_call_operand.hbm [shape: f32[32,96], index: 1, kind: input, shape index: {}]
  %s2 = inlined_call_operand.hbm [shape: f32[32,32], index: 2, kind: input, shape index: {}]
  %s3 = inlined_call_operand.hbm [shape: f32[16,32], index: 3, kind: output, shape index: {}]
  %s4 = sld [smem:[#allocation0]]
  $region34: #{tpu_custom_call.1} parent=0
    _
  %s6 = ssub.s32 1, %s4
  %s7 = scalar_select 0, %s6, %s4
  $region1: #{tpu_custom_call.1} parent=0
    #allocation2 [shape = 'u8[8192]{0}', space=vmem, size = 0x2000, scoped, tag = 'input window, operand 0, single buffered']
    #allocation3 [shape = 's32[1]{0}', space=sflag, size = 0x4, scoped, tag = 'scoped memory for tpu_custom_call.1']
    #allocation4 [shape = 's32[1]{0}', space=sflag, size = 0x4, scoped, tag = 'scoped memory for tpu_custom_call.1']
    #allocation5 [shape = 'u8[16384]{0}', space=vmem, size = 0x4000, scoped, tag = 'input window, operand 1, single buffered']
    #allocation6 [shape = 's32[1]{0}', space=sflag, size = 0x4, scoped, tag = 'scoped memory for tpu_custom_call.1']
    #allocation7 [shape = 'u8[16384]{0}', space=vmem, size = 0x4000, scoped, tag = 'input window, operand 2, single buffered']
    #allocation8 [shape = 'u8[8192]{0}', space=vmem, size = 0x2000, scoped, tag = 'output window, operand 0, single buffered']
    %8 = vsyncpa [#allocation3], 0
    %9 = vsyncpa [#allocation6], 0
    %10 = vsyncpa [#allocation4], 0
    // Predicated region
    $region2: #{tpu_custom_call.1} parent=1 // pred_check
      _
    $region3: #{tpu_custom_call.1} parent=1 // pred_check_branch
      %12 = sbr.rel (0) target = $region5
    $region4: #{tpu_custom_call.1} parent=1 // pred_region
      %s14 = ssub.s32 256, 256
      %15 = vsyncadd [#allocation3], %s14
      %s16 = sshll.u32 [#allocation2], 4
      %s17 = int_to_ptr.vmem [resolvable:$true] %s16
      %22 = dma.hbm_to_vmem [thread:$0]  %s0, 256, %s17, [#allocation3], 128, 128, 8
    $region5: #{tpu_custom_call.1} parent=1 // pred_fallthru
      _
    // Predicated region
    $region6: #{tpu_custom_call.1} parent=1 // pred_check
      _
    $region7: #{tpu_custom_call.1} parent=1 // pred_check_branch
      %24 = sbr.rel (0) target = $region9
    $region8: #{tpu_custom_call.1} parent=1 // pred_region
      %s26 = ssub.s32 512, 512
      %27 = vsyncadd [#allocation6], %s26
      %s28 = sshll.u32 [#allocation5], 4
      %s29 = int_to_ptr.vmem [resolvable:$true] %s28
      %34 = dma.hbm_to_vmem [thread:$0]  %s1, 512, %s29, [#allocation6], 128, 128, 8
    $region9: #{tpu_custom_call.1} parent=1 // pred_fallthru
      _
    // Predicated region
    $region10: #{tpu_custom_call.1} parent=1 // pred_check
      _
    $region11: #{tpu_custom_call.1} parent=1 // pred_check_branch
      %36 = sbr.rel (0) target = $region13
    $region12: #{tpu_custom_call.1} parent=1 // pred_region
      %s38 = ssub.s32 512, 512
      %39 = vsyncadd [#allocation6], %s38
      %s40 = sshll.u32 [#allocation7], 4
      %s41 = int_to_ptr.vmem [resolvable:$true] %s40
      %46 = dma.hbm_to_vmem [thread:$0]  %s2, 512, %s41, [#allocation6], 128, 128, 8
    $region13: #{tpu_custom_call.1} parent=1 // pred_fallthru
      _
    // Predicated region
    $region14: #{tpu_custom_call.1} parent=1 // pred_check
      _
    $region15: #{tpu_custom_call.1} parent=1 // pred_check_branch
      %48 = sbr.rel (0) target = $region17
    $region16: #{tpu_custom_call.1} parent=1 // pred_region
      %49 = dma.done [#allocation3], 256
    $region17: #{tpu_custom_call.1} parent=1 // pred_fallthru
      _
    // Predicated region
    $region18: #{tpu_custom_call.1} parent=1 // pred_check
      _
    $region19: #{tpu_custom_call.1} parent=1 // pred_check_branch
      %51 = sbr.rel (0) target = $region21
    $region20: #{tpu_custom_call.1} parent=1 // pred_region
      %52 = dma.done [#allocation6], 512
    $region21: #{tpu_custom_call.1} parent=1 // pred_fallthru
      _
    // Predicated region
    $region22: #{tpu_custom_call.1} parent=1 // pred_check
      _
    $region23: #{tpu_custom_call.1} parent=1 // pred_check_branch
      %54 = sbr.rel (0) target = $region25
    $region24: #{tpu_custom_call.1} parent=1 // pred_region
      %55 = dma.done [#allocation6], 512
    $region25: #{tpu_custom_call.1} parent=1 // pred_fallthru
      _
    %v56 = vld [vmem:[#allocation2] sm:$0xff]
    %v57 = vld [vmem:[#allocation2 + $0x8] sm:$0xff]
    %v58 = vld [vmem:[#allocation5] sm:$0xff]
    %v59 = vld [vmem:[#allocation5 + $0x8] sm:$0xff]
    %v60 = vld [vmem:[#allocation5 + $0x10] sm:$0xff]
    %v61 = vld [vmem:[#allocation5 + $0x18] sm:$0xff]
    %vm62 = vcmask 261120
    %v64 = vsel %vm62, %v56, 0
    %v67 = vsel %vm62, %v57, 0
    %69 = vmatprep.subr.mxu0 0.0
    %70 = vmatpush1.msra.mxu0 0.0
    %71 = vmatprep.subr.mxu0 0.0
    %72 = vmatpush1.msra.mxu0 0.0
    %73 = vmatprep.subr.mxu0 0.0
    %74 = vmatpush1.msra.mxu0 0.0
    %75 = vmatprep.subr.mxu0 0.0
    %76 = vmatpush1.msra.mxu0 0.0
    %77 = vmatprep.subr.mxu0 0.0
    %78 = vmatpush1.msra.mxu0 0.0
    %79 = vmatprep.subr.mxu0 0.0
    %80 = vmatpush1.msra.mxu0 0.0
    %81 = vmatprep.subr.mxu0 0.0
    %82 = vmatpush1.msra.mxu0 0.0
    %83 = vmatprep.subr.mxu0 0.0
    %84 = vmatpush1.msra.mxu0 0.0
    %85 = vmatprep.subr.mxu0 0.0
    %86 = vmatpush1.msra.mxu0 0.0
    %87 = vmatprep.subr.mxu0 0.0
    %88 = vmatpush1.msra.mxu0 0.0
    %89 = vmatprep.subr.mxu0 0.0
    %90 = vmatpush1.msra.mxu0 0.0
    %91 = vmatprep.subr.mxu0 0.0
    %92 = vmatpush1.msra.mxu0 0.0
    %93 = vmatprep.subr.mxu0 0.0
    %94 = vmatpush1.msra.mxu0 %v61
    %95 = vmatprep.subr.mxu0 0.0
    %96 = vmatpush1.msra.mxu0 %v60
    %97 = vmatprep.subr.mxu0 0.0
    %98 = vmatpush1.msra.mxu0 %v59
    %99 = vmatprep.subr.mxu0 0.0
    %100 = vmatpush1.msra.mxu0 %v58
    %101 = vmatprep.subr.mxu0 0.0
    %102 = vmatpush2.msra.mxu0 0.0
    %103 = vmatprep.subr.mxu0 0.0
    %104 = vmatpush2.msra.mxu0 0.0
    %105 = vmatprep.subr.mxu0 0.0
    %106 = vmatpush2.msra.mxu0 0.0
    %107 = vmatprep.subr.mxu0 0.0
    %108 = vmatpush2.msra.mxu0 0.0
    %109 = vmatprep.subr.mxu0 0.0
    %110 = vmatpush2.msra.mxu0 0.0
    %111 = vmatprep.subr.mxu0 0.0
    %112 = vmatpush2.msra.mxu0 0.0
    %113 = vmatprep.subr.mxu0 0.0
    %114 = vmatpush2.msra.mxu0 0.0
    %115 = vmatprep.subr.mxu0 0.0
    %116 = vmatpush2.msra.mxu0 0.0
    %117 = vmatprep.subr.mxu0 0.0
    %118 = vmatpush2.msra.mxu0 0.0
    %119 = vmatprep.subr.mxu0 0.0
    %120 = vmatpush2.msra.mxu0 0.0
    %121 = vmatprep.subr.mxu0 0.0
    %122 = vmatpush2.msra.mxu0 0.0
    %123 = vmatprep.subr.mxu0 0.0
    %124 = vmatpush2.msra.mxu0 0.0
    %125 = vmatprep.subr.mxu0 0.0
    %126 = vmatpush2.msra.mxu0 0.0
    %127 = vmatprep.subr.mxu0 0.0
    %128 = vmatpush2.msra.mxu0 0.0
    %129 = vmatprep.subr.mxu0 0.0
    %130 = vmatpush2.msra.mxu0 0.0
    %131 = vmatprep.subr.mxu0 0.0
    %132 = vmatpush2.msra.mxu0 0.0
    %133 = vmatprep.mubr.f32.mxu0 0.0
    %134 = vmatmul.mubr.f32.gmra.mxu0 %v64
    %v135 = vpop.f32.mrf.mxu0
    %v136 = vadd.f32 0.0, %v135
    %v137 = vpop.f32.mrf.mxu0
    %138 = vmatprep.mubr.f32.mxu0 0.0
    %139 = vmatmul.mubr.f32.gmra.mxu0 %v67
    %v140 = vpop.f32.mrf.mxu0
    %v141 = vadd.f32 0.0, %v140
    %v142 = vpop.f32.mrf.mxu0
    %143 = vdwg.mxu0
    %145 = vrot.lane.b32.xlu0 %v136, 96
    %v146 = vpop.permute.xlu0 %145
    %vm147 = vcmask 64512
    %v148 = vsel %vm147, %v136, 0
    %v150 = vsel %vm147, %v146, 0
    %152 = vmatprep.subr.mxu0 0.0
    %153 = vmatpush1.xpose.msra.mxu0 0.0
    %154 = vmatprep.subr.mxu0 0.0
    %155 = vmatpush1.xpose.msra.mxu0 0.0
    %156 = vmatprep.subr.mxu0 0.0
    %157 = vmatpush1.xpose.msra.mxu0 0.0
    %158 = vmatprep.subr.mxu0 0.0
    %159 = vmatpush1.xpose.msra.mxu0 0.0
    %160 = vmatprep.subr.mxu0 0.0
    %161 = vmatpush1.xpose.msra.mxu0 0.0
    %162 = vmatprep.subr.mxu0 0.0
    %163 = vmatpush1.xpose.msra.mxu0 0.0
    %164 = vmatprep.subr.mxu0 0.0
    %165 = vmatpush1.xpose.msra.mxu0 0.0
    %166 = vmatprep.subr.mxu0 0.0
    %167 = vmatpush1.xpose.msra.mxu0 0.0
    %168 = vmatprep.subr.mxu0 0.0
    %169 = vmatpush1.xpose.msra.mxu0 0.0
    %170 = vmatprep.subr.mxu0 0.0
    %171 = vmatpush1.xpose.msra.mxu0 0.0
    %172 = vmatprep.subr.mxu0 0.0
    %173 = vmatpush1.xpose.msra.mxu0 0.0
    %174 = vmatprep.subr.mxu0 0.0
    %175 = vmatpush1.xpose.msra.mxu0 0.0
    %176 = vmatprep.subr.mxu0 0.0
    %177 = vmatpush1.xpose.msra.mxu0 0.0
    %178 = vmatprep.subr.mxu0 0.0
    %179 = vmatpush1.xpose.msra.mxu0 0.0
    %180 = vmatprep.subr.mxu0 0.0
    %181 = vmatpush1.xpose.msra.mxu0 0.0
    %182 = vmatprep.subr.mxu0 0.0
    %183 = vmatpush1.xpose.msra.mxu0 %v150
    %184 = vmatprep.subr.mxu0 0.0
    %185 = vmatpush2.xpose.msra.mxu0 0.0
    %186 = vmatprep.subr.mxu0 0.0
    %187 = vmatpush2.xpose.msra.mxu0 0.0
    %188 = vmatprep.subr.mxu0 0.0
    %189 = vmatpush2.xpose.msra.mxu0 0.0
    %190 = vmatprep.subr.mxu0 0.0
    %191 = vmatpush2.xpose.msra.mxu0 0.0
    %192 = vmatprep.subr.mxu0 0.0
    %193 = vmatpush2.xpose.msra.mxu0 0.0
    %194 = vmatprep.subr.mxu0 0.0
    %195 = vmatpush2.xpose.msra.mxu0 0.0
    %196 = vmatprep.subr.mxu0 0.0
    %197 = vmatpush2.xpose.msra.mxu0 0.0
    %198 = vmatprep.subr.mxu0 0.0
    %199 = vmatpush2.xpose.msra.mxu0 0.0
    %200 = vmatprep.subr.mxu0 0.0
    %201 = vmatpush2.xpose.msra.mxu0 0.0
    %202 = vmatprep.subr.mxu0 0.0
    %203 = vmatpush2.xpose.msra.mxu0 0.0
    %204 = vmatprep.subr.mxu0 0.0
    %205 = vmatpush2.xpose.msra.mxu0 0.0
    %206 = vmatprep.subr.mxu0 0.0
    %207 = vmatpush2.xpose.msra.mxu0 0.0
    %208 = vmatprep.subr.mxu0 0.0
    %209 = vmatpush2.xpose.msra.mxu0 0.0
    %210 = vmatprep.subr.mxu0 0.0
    %211 = vmatpush2.xpose.msra.mxu0 0.0
    %212 = vmatprep.subr.mxu0 0.0
    %213 = vmatpush2.xpose.msra.mxu0 0.0
    %214 = vmatprep.subr.mxu0 0.0
    %215 = vmatpush2.xpose.msra.mxu0 0.0
    %216 = vmatprep.mubr.f32.mxu0 0.0
    %217 = vmatmul.mubr.f32.gmra.mxu0 %v148
    %v218 = vpop.f32.mrf.mxu0
    %v219 = vadd.f32 0.0, %v218
    %v220 = vpop.f32.mrf.mxu0
    %221 = vdwg.mxu0
    %222 = vrot.lane.b32.xlu0 %v136, 120
    %v223 = vpop.permute.xlu0 %222
    %224 = vrot.lane.b32.xlu0 %v136, 88
    %v225 = vpop.permute.xlu0 %224
    %v226 = vsel %vm147, %v223, 0
    %v228 = vsel %vm147, %v225, 0
    %230 = vmatprep.subr.mxu0 0.0
    %231 = vmatpush1.xpose.msra.mxu0 0.0
    %232 = vmatprep.subr.mxu0 0.0
    %233 = vmatpush1.xpose.msra.mxu0 0.0
    %234 = vmatprep.subr.mxu0 0.0
    %235 = vmatpush1.xpose.msra.mxu0 0.0
    %236 = vmatprep.subr.mxu0 0.0
    %237 = vmatpush1.xpose.msra.mxu0 0.0
    %238 = vmatprep.subr.mxu0 0.0
    %239 = vmatpush1.xpose.msra.mxu0 0.0
    %240 = vmatprep.subr.mxu0 0.0
    %241 = vmatpush1.xpose.msra.mxu0 0.0
    %242 = vmatprep.subr.mxu0 0.0
    %243 = vmatpush1.xpose.msra.mxu0 0.0
    %244 = vmatprep.subr.mxu0 0.0
    %245 = vmatpush1.xpose.msra.mxu0 0.0
    %246 = vmatprep.subr.mxu0 0.0
    %247 = vmatpush1.xpose.msra.mxu0 0.0
    %248 = vmatprep.subr.mxu0 0.0
    %249 = vmatpush1.xpose.msra.mxu0 0.0
    %250 = vmatprep.subr.mxu0 0.0
    %251 = vmatpush1.xpose.msra.mxu0 0.0
    %252 = vmatprep.subr.mxu0 0.0
    %253 = vmatpush1.xpose.msra.mxu0 0.0
    %254 = vmatprep.subr.mxu0 0.0
    %255 = vmatpush1.xpose.msra.mxu0 0.0
    %256 = vmatprep.subr.mxu0 0.0
    %257 = vmatpush1.xpose.msra.mxu0 0.0
    %258 = vmatprep.subr.mxu0 0.0
    %259 = vmatpush1.xpose.msra.mxu0 0.0
    %260 = vmatprep.subr.mxu0 0.0
    %261 = vmatpush1.xpose.msra.mxu0 %v228
    %262 = vmatprep.subr.mxu0 0.0
    %263 = vmatpush2.xpose.msra.mxu0 0.0
    %264 = vmatprep.subr.mxu0 0.0
    %265 = vmatpush2.xpose.msra.mxu0 0.0
    %266 = vmatprep.subr.mxu0 0.0
    %267 = vmatpush2.xpose.msra.mxu0 0.0
    %268 = vmatprep.subr.mxu0 0.0
    %269 = vmatpush2.xpose.msra.mxu0 0.0
    %270 = vmatprep.subr.mxu0 0.0
    %271 = vmatpush2.xpose.msra.mxu0 0.0
    %272 = vmatprep.subr.mxu0 0.0
    %273 = vmatpush2.xpose.msra.mxu0 0.0
    %274 = vmatprep.subr.mxu0 0.0
    %275 = vmatpush2.xpose.msra.mxu0 0.0
    %276 = vmatprep.subr.mxu0 0.0
    %277 = vmatpush2.xpose.msra.mxu0 0.0
    %278 = vmatprep.subr.mxu0 0.0
    %279 = vmatpush2.xpose.msra.mxu0 0.0
    %280 = vmatprep.subr.mxu0 0.0
    %281 = vmatpush2.xpose.msra.mxu0 0.0
    %282 = vmatprep.subr.mxu0 0.0
    %283 = vmatpush2.xpose.msra.mxu0 0.0
    %284 = vmatprep.subr.mxu0 0.0
    %285 = vmatpush2.xpose.msra.mxu0 0.0
    %286 = vmatprep.subr.mxu0 0.0
    %287 = vmatpush2.xpose.msra.mxu0 0.0
    %288 = vmatprep.subr.mxu0 0.0
    %289 = vmatpush2.xpose.msra.mxu0 0.0
    %290 = vmatprep.subr.mxu0 0.0
    %291 = vmatpush2.xpose.msra.mxu0 0.0
    %292 = vmatprep.subr.mxu0 0.0
    %293 = vmatpush2.xpose.msra.mxu0 0.0
    %294 = vmatprep.mubr.f32.mxu0 0.0
    %295 = vmatmul.mubr.f32.gmra.mxu0 %v226
    %v296 = vpop.f32.mrf.mxu0
    %v297 = vadd.f32 0.0, %v296
    %v298 = vpop.f32.mrf.mxu0
    %299 = vdwg.mxu0
    %300 = vrot.lane.b32.xlu0 %v136, 112
    %v301 = vpop.permute.xlu0 %300
    %302 = vrot.lane.b32.xlu0 %v136, 80
    %v303 = vpop.permute.xlu0 %302
    %v304 = vsel %vm147, %v301, 0
    %v306 = vsel %vm147, %v303, 0
    %308 = vmatprep.subr.mxu0 0.0
    %309 = vmatpush1.xpose.msra.mxu0 0.0
    %310 = vmatprep.subr.mxu0 0.0
    %311 = vmatpush1.xpose.msra.mxu0 0.0
    %312 = vmatprep.subr.mxu0 0.0
    %313 = vmatpush1.xpose.msra.mxu0 0.0
    %314 = vmatprep.subr.mxu0 0.0
    %315 = vmatpush1.xpose.msra.mxu0 0.0
    %316 = vmatprep.subr.mxu0 0.0
    %317 = vmatpush1.xpose.msra.mxu0 0.0
    %318 = vmatprep.subr.mxu0 0.0
    %319 = vmatpush1.xpose.msra.mxu0 0.0
    %320 = vmatprep.subr.mxu0 0.0
    %321 = vmatpush1.xpose.msra.mxu0 0.0
    %322 = vmatprep.subr.mxu0 0.0
    %323 = vmatpush1.xpose.msra.mxu0 0.0
    %324 = vmatprep.subr.mxu0 0.0
    %325 = vmatpush1.xpose.msra.mxu0 0.0
    %326 = vmatprep.subr.mxu0 0.0
    %327 = vmatpush1.xpose.msra.mxu0 0.0
    %328 = vmatprep.subr.mxu0 0.0
    %329 = vmatpush1.xpose.msra.mxu0 0.0
    %330 = vmatprep.subr.mxu0 0.0
    %331 = vmatpush1.xpose.msra.mxu0 0.0
    %332 = vmatprep.subr.mxu0 0.0
    %333 = vmatpush1.xpose.msra.mxu0 0.0
    %334 = vmatprep.subr.mxu0 0.0
    %335 = vmatpush1.xpose.msra.mxu0 0.0
    %336 = vmatprep.subr.mxu0 0.0
    %337 = vmatpush1.xpose.msra.mxu0 0.0
    %338 = vmatprep.subr.mxu0 0.0
    %339 = vmatpush1.xpose.msra.mxu0 %v306
    %340 = vmatprep.subr.mxu0 0.0
    %341 = vmatpush2.xpose.msra.mxu0 0.0
    %342 = vmatprep.subr.mxu0 0.0
    %343 = vmatpush2.xpose.msra.mxu0 0.0
    %344 = vmatprep.subr.mxu0 0.0
    %345 = vmatpush2.xpose.msra.mxu0 0.0
    %346 = vmatprep.subr.mxu0 0.0
    %347 = vmatpush2.xpose.msra.mxu0 0.0
    %348 = vmatprep.subr.mxu0 0.0
    %349 = vmatpush2.xpose.msra.mxu0 0.0
    %350 = vmatprep.subr.mxu0 0.0
    %351 = vmatpush2.xpose.msra.mxu0 0.0
    %352 = vmatprep.subr.mxu0 0.0
    %353 = vmatpush2.xpose.msra.mxu0 0.0
    %354 = vmatprep.subr.mxu0 0.0
    %355 = vmatpush2.xpose.msra.mxu0 0.0
    %356 = vmatprep.subr.mxu0 0.0
    %357 = vmatpush2.xpose.msra.mxu0 0.0
    %358 = vmatprep.subr.mxu0 0.0
    %359 = vmatpush2.xpose.msra.mxu0 0.0
    %360 = vmatprep.subr.mxu0 0.0
    %361 = vmatpush2.xpose.msra.mxu0 0.0
    %362 = vmatprep.subr.mxu0 0.0
    %363 = vmatpush2.xpose.msra.mxu0 0.0
    %364 = vmatprep.subr.mxu0 0.0
    %365 = vmatpush2.xpose.msra.mxu0 0.0
    %366 = vmatprep.subr.mxu0 0.0
    %367 = vmatpush2.xpose.msra.mxu0 0.0
    %368 = vmatprep.subr.mxu0 0.0
    %369 = vmatpush2.xpose.msra.mxu0 0.0
    %370 = vmatprep.subr.mxu0 0.0
    %371 = vmatpush2.xpose.msra.mxu0 0.0
    %372 = vmatprep.mubr.f32.mxu0 0.0
    %373 = vmatmul.mubr.f32.gmra.mxu0 %v304
    %v374 = vpop.f32.mrf.mxu0
    %v375 = vadd.f32 0.0, %v374
    %v376 = vpop.f32.mrf.mxu0
    %377 = vdwg.mxu0
    %378 = vrot.lane.b32.xlu0 %v136, 104
    %v379 = vpop.permute.xlu0 %378
    %380 = vrot.lane.b32.xlu0 %v136, 72
    %v381 = vpop.permute.xlu0 %380
    %v382 = vsel %vm147, %v379, 0
    %v384 = vsel %vm147, %v381, 0
    %386 = vmatprep.subr.mxu0 0.0
    %387 = vmatpush1.xpose.msra.mxu0 0.0
    %388 = vmatprep.subr.mxu0 0.0
    %389 = vmatpush1.xpose.msra.mxu0 0.0
    %390 = vmatprep.subr.mxu0 0.0
    %391 = vmatpush1.xpose.msra.mxu0 0.0
    %392 = vmatprep.subr.mxu0 0.0
    %393 = vmatpush1.xpose.msra.mxu0 0.0
    %394 = vmatprep.subr.mxu0 0.0
    %395 = vmatpush1.xpose.msra.mxu0 0.0
    %396 = vmatprep.subr.mxu0 0.0
    %397 = vmatpush1.xpose.msra.mxu0 0.0
    %398 = vmatprep.subr.mxu0 0.0
    %399 = vmatpush1.xpose.msra.mxu0 0.0
    %400 = vmatprep.subr.mxu0 0.0
    %401 = vmatpush1.xpose.msra.mxu0 0.0
    %402 = vmatprep.subr.mxu0 0.0
    %403 = vmatpush1.xpose.msra.mxu0 0.0
    %404 = vmatprep.subr.mxu0 0.0
    %405 = vmatpush1.xpose.msra.mxu0 0.0
    %406 = vmatprep.subr.mxu0 0.0
    %407 = vmatpush1.xpose.msra.mxu0 0.0
    %408 = vmatprep.subr.mxu0 0.0
    %409 = vmatpush1.xpose.msra.mxu0 0.0
    %410 = vmatprep.subr.mxu0 0.0
    %411 = vmatpush1.xpose.msra.mxu0 0.0
    %412 = vmatprep.subr.mxu0 0.0
    %413 = vmatpush1.xpose.msra.mxu0 0.0
    %414 = vmatprep.subr.mxu0 0.0
    %415 = vmatpush1.xpose.msra.mxu0 0.0
    %416 = vmatprep.subr.mxu0 0.0
    %417 = vmatpush1.xpose.msra.mxu0 %v384
    %418 = vmatprep.subr.mxu0 0.0
    %419 = vmatpush2.xpose.msra.mxu0 0.0
    %420 = vmatprep.subr.mxu0 0.0
    %421 = vmatpush2.xpose.msra.mxu0 0.0
    %422 = vmatprep.subr.mxu0 0.0
    %423 = vmatpush2.xpose.msra.mxu0 0.0
    %424 = vmatprep.subr.mxu0 0.0
    %425 = vmatpush2.xpose.msra.mxu0 0.0
    %426 = vmatprep.subr.mxu0 0.0
    %427 = vmatpush2.xpose.msra.mxu0 0.0
    %428 = vmatprep.subr.mxu0 0.0
    %429 = vmatpush2.xpose.msra.mxu0 0.0
    %430 = vmatprep.subr.mxu0 0.0
    %431 = vmatpush2.xpose.msra.mxu0 0.0
    %432 = vmatprep.subr.mxu0 0.0
    %433 = vmatpush2.xpose.msra.mxu0 0.0
    %434 = vmatprep.subr.mxu0 0.0
    %435 = vmatpush2.xpose.msra.mxu0 0.0
    %436 = vmatprep.subr.mxu0 0.0
    %437 = vmatpush2.xpose.msra.mxu0 0.0
    %438 = vmatprep.subr.mxu0 0.0
    %439 = vmatpush2.xpose.msra.mxu0 0.0
    %440 = vmatprep.subr.mxu0 0.0
    %441 = vmatpush2.xpose.msra.mxu0 0.0
    %442 = vmatprep.subr.mxu0 0.0
    %443 = vmatpush2.xpose.msra.mxu0 0.0
    %444 = vmatprep.subr.mxu0 0.0
    %445 = vmatpush2.xpose.msra.mxu0 0.0
    %446 = vmatprep.subr.mxu0 0.0
    %447 = vmatpush2.xpose.msra.mxu0 0.0
    %448 = vmatprep.subr.mxu0 0.0
    %449 = vmatpush2.xpose.msra.mxu0 0.0
    %450 = vmatprep.mubr.f32.mxu0 0.0
    %451 = vmatmul.mubr.f32.gmra.mxu0 %v382
    %v452 = vpop.f32.mrf.mxu0
    %v453 = vadd.f32 0.0, %v452
    %v454 = vpop.f32.mrf.mxu0
    %455 = vdwg.mxu0
    %457 = vrot.lane.b32.xlu0 %v141, 96
    %v458 = vpop.permute.xlu0 %457
    %v459 = vsel %vm147, %v141, 0
    %v461 = vsel %vm147, %v458, 0
    %463 = vmatprep.subr.mxu0 0.0
    %464 = vmatpush1.xpose.msra.mxu0 0.0
    %465 = vmatprep.subr.mxu0 0.0
    %466 = vmatpush1.xpose.msra.mxu0 0.0
    %467 = vmatprep.subr.mxu0 0.0
    %468 = vmatpush1.xpose.msra.mxu0 0.0
    %469 = vmatprep.subr.mxu0 0.0
    %470 = vmatpush1.xpose.msra.mxu0 0.0
    %471 = vmatprep.subr.mxu0 0.0
    %472 = vmatpush1.xpose.msra.mxu0 0.0
    %473 = vmatprep.subr.mxu0 0.0
    %474 = vmatpush1.xpose.msra.mxu0 0.0
    %475 = vmatprep.subr.mxu0 0.0
    %476 = vmatpush1.xpose.msra.mxu0 0.0
    %477 = vmatprep.subr.mxu0 0.0
    %478 = vmatpush1.xpose.msra.mxu0 0.0
    %479 = vmatprep.subr.mxu0 0.0
    %480 = vmatpush1.xpose.msra.mxu0 0.0
    %481 = vmatprep.subr.mxu0 0.0
    %482 = vmatpush1.xpose.msra.mxu0 0.0
    %483 = vmatprep.subr.mxu0 0.0
    %484 = vmatpush1.xpose.msra.mxu0 0.0
    %485 = vmatprep.subr.mxu0 0.0
    %486 = vmatpush1.xpose.msra.mxu0 0.0
    %487 = vmatprep.subr.mxu0 0.0
    %488 = vmatpush1.xpose.msra.mxu0 0.0
    %489 = vmatprep.subr.mxu0 0.0
    %490 = vmatpush1.xpose.msra.mxu0 0.0
    %491 = vmatprep.subr.mxu0 0.0
    %492 = vmatpush1.xpose.msra.mxu0 0.0
    %493 = vmatprep.subr.mxu0 0.0
    %494 = vmatpush1.xpose.msra.mxu0 %v461
    %495 = vmatprep.subr.mxu0 0.0
    %496 = vmatpush2.xpose.msra.mxu0 0.0
    %497 = vmatprep.subr.mxu0 0.0
    %498 = vmatpush2.xpose.msra.mxu0 0.0
    %499 = vmatprep.subr.mxu0 0.0
    %500 = vmatpush2.xpose.msra.mxu0 0.0
    %501 = vmatprep.subr.mxu0 0.0
    %502 = vmatpush2.xpose.msra.mxu0 0.0
    %503 = vmatprep.subr.mxu0 0.0
    %504 = vmatpush2.xpose.msra.mxu0 0.0
    %505 = vmatprep.subr.mxu0 0.0
    %506 = vmatpush2.xpose.msra.mxu0 0.0
    %507 = vmatprep.subr.mxu0 0.0
    %508 = vmatpush2.xpose.msra.mxu0 0.0
    %509 = vmatprep.subr.mxu0 0.0
    %510 = vmatpush2.xpose.msra.mxu0 0.0
    %511 = vmatprep.subr.mxu0 0.0
    %512 = vmatpush2.xpose.msra.mxu0 0.0
    %513 = vmatprep.subr.mxu0 0.0
    %514 = vmatpush2.xpose.msra.mxu0 0.0
    %515 = vmatprep.subr.mxu0 0.0
    %516 = vmatpush2.xpose.msra.mxu0 0.0
    %517 = vmatprep.subr.mxu0 0.0
    %518 = vmatpush2.xpose.msra.mxu0 0.0
    %519 = vmatprep.subr.mxu0 0.0
    %520 = vmatpush2.xpose.msra.mxu0 0.0
    %521 = vmatprep.subr.mxu0 0.0
    %522 = vmatpush2.xpose.msra.mxu0 0.0
    %523 = vmatprep.subr.mxu0 0.0
    %524 = vmatpush2.xpose.msra.mxu0 0.0
    %525 = vmatprep.subr.mxu0 0.0
    %526 = vmatpush2.xpose.msra.mxu0 0.0
    %527 = vmatprep.mubr.f32.mxu0 0.0
    %528 = vmatmul.mubr.f32.gmra.mxu0 %v459
    %v529 = vpop.f32.mrf.mxu0
    %v530 = vadd.f32 0.0, %v529
    %v531 = vpop.f32.mrf.mxu0
    %532 = vdwg.mxu0
    %533 = vrot.lane.b32.xlu0 %v141, 120
    %v534 = vpop.permute.xlu0 %533
    %535 = vrot.lane.b32.xlu0 %v141, 88
    %v536 = vpop.permute.xlu0 %535
    %v537 = vsel %vm147, %v534, 0
    %v539 = vsel %vm147, %v536, 0
    %541 = vmatprep.subr.mxu0 0.0
    %542 = vmatpush1.xpose.msra.mxu0 0.0
    %543 = vmatprep.subr.mxu0 0.0
    %544 = vmatpush1.xpose.msra.mxu0 0.0
    %545 = vmatprep.subr.mxu0 0.0
    %546 = vmatpush1.xpose.msra.mxu0 0.0
    %547 = vmatprep.subr.mxu0 0.0
    %548 = vmatpush1.xpose.msra.mxu0 0.0
    %549 = vmatprep.subr.mxu0 0.0
    %550 = vmatpush1.xpose.msra.mxu0 0.0
    %551 = vmatprep.subr.mxu0 0.0
    %552 = vmatpush1.xpose.msra.mxu0 0.0
    %553 = vmatprep.subr.mxu0 0.0
    %554 = vmatpush1.xpose.msra.mxu0 0.0
    %555 = vmatprep.subr.mxu0 0.0
    %556 = vmatpush1.xpose.msra.mxu0 0.0
    %557 = vmatprep.subr.mxu0 0.0
    %558 = vmatpush1.xpose.msra.mxu0 0.0
    %559 = vmatprep.subr.mxu0 0.0
    %560 = vmatpush1.xpose.msra.mxu0 0.0
    %561 = vmatprep.subr.mxu0 0.0
    %562 = vmatpush1.xpose.msra.mxu0 0.0
    %563 = vmatprep.subr.mxu0 0.0
    %564 = vmatpush1.xpose.msra.mxu0 0.0
    %565 = vmatprep.subr.mxu0 0.0
    %566 = vmatpush1.xpose.msra.mxu0 0.0
    %567 = vmatprep.subr.mxu0 0.0
    %568 = vmatpush1.xpose.msra.mxu0 0.0
    %569 = vmatprep.subr.mxu0 0.0
    %570 = vmatpush1.xpose.msra.mxu0 0.0
    %571 = vmatprep.subr.mxu0 0.0
    %572 = vmatpush1.xpose.msra.mxu0 %v539
    %573 = vmatprep.subr.mxu0 0.0
    %574 = vmatpush2.xpose.msra.mxu0 0.0
    %575 = vmatprep.subr.mxu0 0.0
    %576 = vmatpush2.xpose.msra.mxu0 0.0
    %577 = vmatprep.subr.mxu0 0.0
    %578 = vmatpush2.xpose.msra.mxu0 0.0
    %579 = vmatprep.subr.mxu0 0.0
    %580 = vmatpush2.xpose.msra.mxu0 0.0
    %581 = vmatprep.subr.mxu0 0.0
    %582 = vmatpush2.xpose.msra.mxu0 0.0
    %583 = vmatprep.subr.mxu0 0.0
    %584 = vmatpush2.xpose.msra.mxu0 0.0
    %585 = vmatprep.subr.mxu0 0.0
    %586 = vmatpush2.xpose.msra.mxu0 0.0
    %587 = vmatprep.subr.mxu0 0.0
    %588 = vmatpush2.xpose.msra.mxu0 0.0
    %589 = vmatprep.subr.mxu0 0.0
    %590 = vmatpush2.xpose.msra.mxu0 0.0
    %591 = vmatprep.subr.mxu0 0.0
    %592 = vmatpush2.xpose.msra.mxu0 0.0
    %593 = vmatprep.subr.mxu0 0.0
    %594 = vmatpush2.xpose.msra.mxu0 0.0
    %595 = vmatprep.subr.mxu0 0.0
    %596 = vmatpush2.xpose.msra.mxu0 0.0
    %597 = vmatprep.subr.mxu0 0.0
    %598 = vmatpush2.xpose.msra.mxu0 0.0
    %599 = vmatprep.subr.mxu0 0.0
    %600 = vmatpush2.xpose.msra.mxu0 0.0
    %601 = vmatprep.subr.mxu0 0.0
    %602 = vmatpush2.xpose.msra.mxu0 0.0
    %603 = vmatprep.subr.mxu0 0.0
    %604 = vmatpush2.xpose.msra.mxu0 0.0
    %605 = vmatprep.mubr.f32.mxu0 0.0
    %606 = vmatmul.mubr.f32.gmra.mxu0 %v537
    %v607 = vpop.f32.mrf.mxu0
    %v608 = vadd.f32 0.0, %v607
    %v609 = vpop.f32.mrf.mxu0
    %610 = vdwg.mxu0
    %611 = vrot.lane.b32.xlu0 %v141, 112
    %v612 = vpop.permute.xlu0 %611
    %613 = vrot.lane.b32.xlu0 %v141, 80
    %v614 = vpop.permute.xlu0 %613
    %v615 = vsel %vm147, %v612, 0
    %v617 = vsel %vm147, %v614, 0
    %619 = vmatprep.subr.mxu0 0.0
    %620 = vmatpush1.xpose.msra.mxu0 0.0
    %621 = vmatprep.subr.mxu0 0.0
    %622 = vmatpush1.xpose.msra.mxu0 0.0
    %623 = vmatprep.subr.mxu0 0.0
    %624 = vmatpush1.xpose.msra.mxu0 0.0
    %625 = vmatprep.subr.mxu0 0.0
    %626 = vmatpush1.xpose.msra.mxu0 0.0
    %627 = vmatprep.subr.mxu0 0.0
    %628 = vmatpush1.xpose.msra.mxu0 0.0
    %629 = vmatprep.subr.mxu0 0.0
    %630 = vmatpush1.xpose.msra.mxu0 0.0
    %631 = vmatprep.subr.mxu0 0.0
    %632 = vmatpush1.xpose.msra.mxu0 0.0
    %633 = vmatprep.subr.mxu0 0.0
    %634 = vmatpush1.xpose.msra.mxu0 0.0
    %635 = vmatprep.subr.mxu0 0.0
    %636 = vmatpush1.xpose.msra.mxu0 0.0
    %637 = vmatprep.subr.mxu0 0.0
    %638 = vmatpush1.xpose.msra.mxu0 0.0
    %639 = vmatprep.subr.mxu0 0.0
    %640 = vmatpush1.xpose.msra.mxu0 0.0
    %641 = vmatprep.subr.mxu0 0.0
    %642 = vmatpush1.xpose.msra.mxu0 0.0
    %643 = vmatprep.subr.mxu0 0.0
    %644 = vmatpush1.xpose.msra.mxu0 0.0
    %645 = vmatprep.subr.mxu0 0.0
    %646 = vmatpush1.xpose.msra.mxu0 0.0
    %647 = vmatprep.subr.mxu0 0.0
    %648 = vmatpush1.xpose.msra.mxu0 0.0
    %649 = vmatprep.subr.mxu0 0.0
    %650 = vmatpush1.xpose.msra.mxu0 %v617
    %651 = vmatprep.subr.mxu0 0.0
    %652 = vmatpush2.xpose.msra.mxu0 0.0
    %653 = vmatprep.subr.mxu0 0.0
    %654 = vmatpush2.xpose.msra.mxu0 0.0
    %655 = vmatprep.subr.mxu0 0.0
    %656 = vmatpush2.xpose.msra.mxu0 0.0
    %657 = vmatprep.subr.mxu0 0.0
    %658 = vmatpush2.xpose.msra.mxu0 0.0
    %659 = vmatprep.subr.mxu0 0.0
    %660 = vmatpush2.xpose.msra.mxu0 0.0
    %661 = vmatprep.subr.mxu0 0.0
    %662 = vmatpush2.xpose.msra.mxu0 0.0
    %663 = vmatprep.subr.mxu0 0.0
    %664 = vmatpush2.xpose.msra.mxu0 0.0
    %665 = vmatprep.subr.mxu0 0.0
    %666 = vmatpush2.xpose.msra.mxu0 0.0
    %667 = vmatprep.subr.mxu0 0.0
    %668 = vmatpush2.xpose.msra.mxu0 0.0
    %669 = vmatprep.subr.mxu0 0.0
    %670 = vmatpush2.xpose.msra.mxu0 0.0
    %671 = vmatprep.subr.mxu0 0.0
    %672 = vmatpush2.xpose.msra.mxu0 0.0
    %673 = vmatprep.subr.mxu0 0.0
    %674 = vmatpush2.xpose.msra.mxu0 0.0
    %675 = vmatprep.subr.mxu0 0.0
    %676 = vmatpush2.xpose.msra.mxu0 0.0
    %677 = vmatprep.subr.mxu0 0.0
    %678 = vmatpush2.xpose.msra.mxu0 0.0
    %679 = vmatprep.subr.mxu0 0.0
    %680 = vmatpush2.xpose.msra.mxu0 0.0
    %681 = vmatprep.subr.mxu0 0.0
    %682 = vmatpush2.xpose.msra.mxu0 0.0
    %683 = vmatprep.mubr.f32.mxu0 0.0
    %684 = vmatmul.mubr.f32.gmra.mxu0 %v615
    %v685 = vpop.f32.mrf.mxu0
    %v686 = vadd.f32 0.0, %v685
    %v687 = vpop.f32.mrf.mxu0
    %688 = vdwg.mxu0
    %689 = vrot.lane.b32.xlu0 %v141, 104
    %v690 = vpop.permute.xlu0 %689
    %691 = vrot.lane.b32.xlu0 %v141, 72
    %v692 = vpop.permute.xlu0 %691
    %v693 = vsel %vm147, %v690, 0
    %v695 = vsel %vm147, %v692, 0
    %697 = vmatprep.subr.mxu0 0.0
    %698 = vmatpush1.xpose.msra.mxu0 0.0
    %699 = vmatprep.subr.mxu0 0.0
    %700 = vmatpush1.xpose.msra.mxu0 0.0
    %701 = vmatprep.subr.mxu0 0.0
    %702 = vmatpush1.xpose.msra.mxu0 0.0
    %703 = vmatprep.subr.mxu0 0.0
    %704 = vmatpush1.xpose.msra.mxu0 0.0
    %705 = vmatprep.subr.mxu0 0.0
    %706 = vmatpush1.xpose.msra.mxu0 0.0
    %707 = vmatprep.subr.mxu0 0.0
    %708 = vmatpush1.xpose.msra.mxu0 0.0
    %709 = vmatprep.subr.mxu0 0.0
    %710 = vmatpush1.xpose.msra.mxu0 0.0
    %711 = vmatprep.subr.mxu0 0.0
    %712 = vmatpush1.xpose.msra.mxu0 0.0
    %713 = vmatprep.subr.mxu0 0.0
    %714 = vmatpush1.xpose.msra.mxu0 0.0
    %715 = vmatprep.subr.mxu0 0.0
    %716 = vmatpush1.xpose.msra.mxu0 0.0
    %717 = vmatprep.subr.mxu0 0.0
    %718 = vmatpush1.xpose.msra.mxu0 0.0
    %719 = vmatprep.subr.mxu0 0.0
    %720 = vmatpush1.xpose.msra.mxu0 0.0
    %721 = vmatprep.subr.mxu0 0.0
    %722 = vmatpush1.xpose.msra.mxu0 0.0
    %723 = vmatprep.subr.mxu0 0.0
    %724 = vmatpush1.xpose.msra.mxu0 0.0
    %725 = vmatprep.subr.mxu0 0.0
    %726 = vmatpush1.xpose.msra.mxu0 0.0
    %727 = vmatprep.subr.mxu0 0.0
    %728 = vmatpush1.xpose.msra.mxu0 %v695
    %729 = vmatprep.subr.mxu0 0.0
    %730 = vmatpush2.xpose.msra.mxu0 0.0
    %731 = vmatprep.subr.mxu0 0.0
    %732 = vmatpush2.xpose.msra.mxu0 0.0
    %733 = vmatprep.subr.mxu0 0.0
    %734 = vmatpush2.xpose.msra.mxu0 0.0
    %735 = vmatprep.subr.mxu0 0.0
    %736 = vmatpush2.xpose.msra.mxu0 0.0
    %737 = vmatprep.subr.mxu0 0.0
    %738 = vmatpush2.xpose.msra.mxu0 0.0
    %739 = vmatprep.subr.mxu0 0.0
    %740 = vmatpush2.xpose.msra.mxu0 0.0
    %741 = vmatprep.subr.mxu0 0.0
    %742 = vmatpush2.xpose.msra.mxu0 0.0
    %743 = vmatprep.subr.mxu0 0.0
    %744 = vmatpush2.xpose.msra.mxu0 0.0
    %745 = vmatprep.subr.mxu0 0.0
    %746 = vmatpush2.xpose.msra.mxu0 0.0
    %747 = vmatprep.subr.mxu0 0.0
    %748 = vmatpush2.xpose.msra.mxu0 0.0
    %749 = vmatprep.subr.mxu0 0.0
    %750 = vmatpush2.xpose.msra.mxu0 0.0
    %751 = vmatprep.subr.mxu0 0.0
    %752 = vmatpush2.xpose.msra.mxu0 0.0
    %753 = vmatprep.subr.mxu0 0.0
    %754 = vmatpush2.xpose.msra.mxu0 0.0
    %755 = vmatprep.subr.mxu0 0.0
    %756 = vmatpush2.xpose.msra.mxu0 0.0
    %757 = vmatprep.subr.mxu0 0.0
    %758 = vmatpush2.xpose.msra.mxu0 0.0
    %759 = vmatprep.subr.mxu0 0.0
    %760 = vmatpush2.xpose.msra.mxu0 0.0
    %761 = vmatprep.mubr.f32.mxu0 0.0
    %762 = vmatmul.mubr.f32.gmra.mxu0 %v693
    %v763 = vpop.f32.mrf.mxu0
    %v764 = vadd.f32 0.0, %v763
    %v765 = vpop.f32.mrf.mxu0
    %766 = vdwg.mxu0
    %v767 = vsel %vm147, %v219, -inf
    %768 = vmax.xlane.f32.xlu0 %v767
    %v769 = vpop.xlane.xlu0 %768
    %v770 = vsel %vm147, %v297, -inf
    %771 = vmax.xlane.f32.xlu0 %v770
    %v772 = vpop.xlane.xlu0 %771
    %v773 = vsel %vm147, %v375, -inf
    %774 = vmax.xlane.f32.xlu0 %v773
    %v775 = vpop.xlane.xlu0 %774
    %v776 = vsel %vm147, %v453, -inf
    %777 = vmax.xlane.f32.xlu0 %v776
    %v778 = vpop.xlane.xlu0 %777
    %v779 = vsel %vm147, %v530, -inf
    %780 = vmax.xlane.f32.xlu0 %v779
    %v781 = vpop.xlane.xlu0 %780
    %v782 = vsel %vm147, %v608, -inf
    %783 = vmax.xlane.f32.xlu0 %v782
    %v784 = vpop.xlane.xlu0 %783
    %v785 = vsel %vm147, %v686, -inf
    %786 = vmax.xlane.f32.xlu0 %v785
    %v787 = vpop.xlane.xlu0 %786
    %v788 = vsel %vm147, %v764, -inf
    %789 = vmax.xlane.f32.xlu0 %v788
    %v790 = vpop.xlane.xlu0 %789
    %v791 = vsub.f32 %v219, %v769
    %v792 = vsub.f32 %v297, %v772
    %v793 = vsub.f32 %v375, %v775
    %v794 = vsub.f32 %v453, %v778
    %v795 = vsub.f32 %v530, %v781
    %v796 = vsub.f32 %v608, %v784
    %v797 = vsub.f32 %v686, %v787
    %v798 = vsub.f32 %v764, %v790
    %v799 = vmul.f32 %v791, 1.442695
    %v800 = vpow.pop %v799
    %v801 = vmul.f32 %v792, 1.442695
    %v802 = vpow.pop %v801
    %v803 = vmul.f32 %v793, 1.442695
    %v804 = vpow.pop %v803
    %v805 = vmul.f32 %v794, 1.442695
    %v806 = vpow.pop %v805
    %v807 = vmul.f32 %v795, 1.442695
    %v808 = vpow.pop %v807
    %v809 = vmul.f32 %v796, 1.442695
    %v810 = vpow.pop %v809
    %v811 = vmul.f32 %v797, 1.442695
    %v812 = vpow.pop %v811
    %v813 = vmul.f32 %v798, 1.442695
    %v814 = vpow.pop %v813
    %v815 = vsel %vm147, %v800, 0.0
    %816 = vadd.xlane.f32.xlu0 %v815
    %v817 = vpop.xlane.xlu0 %816
    %v818 = vsel %vm147, %v802, 0.0
    %819 = vadd.xlane.f32.xlu0 %v818
    %v820 = vpop.xlane.xlu0 %819
    %v821 = vsel %vm147, %v804, 0.0
    %822 = vadd.xlane.f32.xlu0 %v821
    %v823 = vpop.xlane.xlu0 %822
    %v824 = vsel %vm147, %v806, 0.0
    %825 = vadd.xlane.f32.xlu0 %v824
    %v826 = vpop.xlane.xlu0 %825
    %v827 = vsel %vm147, %v808, 0.0
    %828 = vadd.xlane.f32.xlu0 %v827
    %v829 = vpop.xlane.xlu0 %828
    %v830 = vsel %vm147, %v810, 0.0
    %831 = vadd.xlane.f32.xlu0 %v830
    %v832 = vpop.xlane.xlu0 %831
    %v833 = vsel %vm147, %v812, 0.0
    %834 = vadd.xlane.f32.xlu0 %v833
    %v835 = vpop.xlane.xlu0 %834
    %v836 = vsel %vm147, %v814, 0.0
    %837 = vadd.xlane.f32.xlu0 %v836
    %v838 = vpop.xlane.xlu0 %837
    %v839 = vrcp.pop %v817
    %v840 = vrcp.pop %v820
    %v841 = vrcp.pop %v823
    %v842 = vrcp.pop %v826
    %v843 = vrcp.pop %v829
    %v844 = vrcp.pop %v832
    %v845 = vrcp.pop %v835
    %v846 = vrcp.pop %v838
    %v847 = vmul.f32 %v800, %v839
    %v848 = vmul.f32 %v802, %v840
    %v849 = vmul.f32 %v804, %v841
    %v850 = vmul.f32 %v806, %v842
    %v851 = vmul.f32 %v808, %v843
    %v852 = vmul.f32 %v810, %v844
    %v853 = vmul.f32 %v812, %v845
    %v854 = vmul.f32 %v814, %v846
    %855 = vrot.lane.b32.xlu0 %v136, 64
    %v856 = vpop.permute.xlu0 %855
    %v859 = vsel %vm147, %v847, 0
    %861 = vmatprep.subr.mxu0 0.0
    %862 = vmatpush1.msra.mxu0 0.0
    %863 = vmatprep.subr.mxu0 0.0
    %864 = vmatpush1.msra.mxu0 0.0
    %865 = vmatprep.subr.mxu0 0.0
    %866 = vmatpush1.msra.mxu0 0.0
    %867 = vmatprep.subr.mxu0 0.0
    %868 = vmatpush1.msra.mxu0 0.0
    %869 = vmatprep.subr.mxu0 0.0
    %870 = vmatpush1.msra.mxu0 0.0
    %871 = vmatprep.subr.mxu0 0.0
    %872 = vmatpush1.msra.mxu0 0.0
    %873 = vmatprep.subr.mxu0 0.0
    %874 = vmatpush1.msra.mxu0 0.0
    %875 = vmatprep.subr.mxu0 0.0
    %876 = vmatpush1.msra.mxu0 0.0
    %877 = vmatprep.subr.mxu0 0.0
    %878 = vmatpush1.msra.mxu0 0.0
    %879 = vmatprep.subr.mxu0 0.0
    %880 = vmatpush1.msra.mxu0 0.0
    %881 = vmatprep.subr.mxu0 0.0
    %882 = vmatpush1.msra.mxu0 0.0
    %883 = vmatprep.subr.mxu0 0.0
    %884 = vmatpush1.msra.mxu0 0.0
    %885 = vmatprep.subr.mxu0 0.0
    %886 = vmatpush1.msra.mxu0 0.0
    %887 = vmatprep.subr.mxu0 0.0
    %888 = vmatpush1.msra.mxu0 0.0
    %889 = vmatprep.subr.mxu0 0.0
    %890 = vmatpush1.msra.mxu0 0.0
    %891 = vmatprep.subr.mxu0 0.0
    %892 = vmatpush1.msra.mxu0 %v856
    %893 = vmatprep.subr.mxu0 0.0
    %894 = vmatpush2.msra.mxu0 0.0
    %895 = vmatprep.subr.mxu0 0.0
    %896 = vmatpush2.msra.mxu0 0.0
    %897 = vmatprep.subr.mxu0 0.0
    %898 = vmatpush2.msra.mxu0 0.0
    %899 = vmatprep.subr.mxu0 0.0
    %900 = vmatpush2.msra.mxu0 0.0
    %901 = vmatprep.subr.mxu0 0.0
    %902 = vmatpush2.msra.mxu0 0.0
    %903 = vmatprep.subr.mxu0 0.0
    %904 = vmatpush2.msra.mxu0 0.0
    %905 = vmatprep.subr.mxu0 0.0
    %906 = vmatpush2.msra.mxu0 0.0
    %907 = vmatprep.subr.mxu0 0.0
    %908 = vmatpush2.msra.mxu0 0.0
    %909 = vmatprep.subr.mxu0 0.0
    %910 = vmatpush2.msra.mxu0 0.0
    %911 = vmatprep.subr.mxu0 0.0
    %912 = vmatpush2.msra.mxu0 0.0
    %913 = vmatprep.subr.mxu0 0.0
    %914 = vmatpush2.msra.mxu0 0.0
    %915 = vmatprep.subr.mxu0 0.0
    %916 = vmatpush2.msra.mxu0 0.0
    %917 = vmatprep.subr.mxu0 0.0
    %918 = vmatpush2.msra.mxu0 0.0
    %919 = vmatprep.subr.mxu0 0.0
    %920 = vmatpush2.msra.mxu0 0.0
    %921 = vmatprep.subr.mxu0 0.0
    %922 = vmatpush2.msra.mxu0 0.0
    %923 = vmatprep.subr.mxu0 0.0
    %924 = vmatpush2.msra.mxu0 0.0
    %925 = vmatprep.mubr.f32.mxu0 0.0
    %926 = vmatmul.mubr.f32.gmra.mxu0 %v859
    %v927 = vpop.f32.mrf.mxu0
    %v928 = vadd.f32 0.0, %v927
    %v929 = vpop.f32.mrf.mxu0
    %930 = vdwg.mxu0
    %931 = vrot.lane.b32.xlu0 %v136, 56
    %v932 = vpop.permute.xlu0 %931
    %v935 = vsel %vm147, %v848, 0
    %937 = vmatprep.subr.mxu0 0.0
    %938 = vmatpush1.msra.mxu0 0.0
    %939 = vmatprep.subr.mxu0 0.0
    %940 = vmatpush1.msra.mxu0 0.0
    %941 = vmatprep.subr.mxu0 0.0
    %942 = vmatpush1.msra.mxu0 0.0
    %943 = vmatprep.subr.mxu0 0.0
    %944 = vmatpush1.msra.mxu0 0.0
    %945 = vmatprep.subr.mxu0 0.0
    %946 = vmatpush1.msra.mxu0 0.0
    %947 = vmatprep.subr.mxu0 0.0
    %948 = vmatpush1.msra.mxu0 0.0
    %949 = vmatprep.subr.mxu0 0.0
    %950 = vmatpush1.msra.mxu0 0.0
    %951 = vmatprep.subr.mxu0 0.0
    %952 = vmatpush1.msra.mxu0 0.0
    %953 = vmatprep.subr.mxu0 0.0
    %954 = vmatpush1.msra.mxu0 0.0
    %955 = vmatprep.subr.mxu0 0.0
    %956 = vmatpush1.msra.mxu0 0.0
    %957 = vmatprep.subr.mxu0 0.0
    %958 = vmatpush1.msra.mxu0 0.0
    %959 = vmatprep.subr.mxu0 0.0
    %960 = vmatpush1.msra.mxu0 0.0
    %961 = vmatprep.subr.mxu0 0.0
    %962 = vmatpush1.msra.mxu0 0.0
    %963 = vmatprep.subr.mxu0 0.0
    %964 = vmatpush1.msra.mxu0 0.0
    %965 = vmatprep.subr.mxu0 0.0
    %966 = vmatpush1.msra.mxu0 0.0
    %967 = vmatprep.subr.mxu0 0.0
    %968 = vmatpush1.msra.mxu0 %v932
    %969 = vmatprep.subr.mxu0 0.0
    %970 = vmatpush2.msra.mxu0 0.0
    %971 = vmatprep.subr.mxu0 0.0
    %972 = vmatpush2.msra.mxu0 0.0
    %973 = vmatprep.subr.mxu0 0.0
    %974 = vmatpush2.msra.mxu0 0.0
    %975 = vmatprep.subr.mxu0 0.0
    %976 = vmatpush2.msra.mxu0 0.0
    %977 = vmatprep.subr.mxu0 0.0
    %978 = vmatpush2.msra.mxu0 0.0
    %979 = vmatprep.subr.mxu0 0.0
    %980 = vmatpush2.msra.mxu0 0.0
    %981 = vmatprep.subr.mxu0 0.0
    %982 = vmatpush2.msra.mxu0 0.0
    %983 = vmatprep.subr.mxu0 0.0
    %984 = vmatpush2.msra.mxu0 0.0
    %985 = vmatprep.subr.mxu0 0.0
    %986 = vmatpush2.msra.mxu0 0.0
    %987 = vmatprep.subr.mxu0 0.0
    %988 = vmatpush2.msra.mxu0 0.0
    %989 = vmatprep.subr.mxu0 0.0
    %990 = vmatpush2.msra.mxu0 0.0
    %991 = vmatprep.subr.mxu0 0.0
    %992 = vmatpush2.msra.mxu0 0.0
    %993 = vmatprep.subr.mxu0 0.0
    %994 = vmatpush2.msra.mxu0 0.0
    %995 = vmatprep.subr.mxu0 0.0
    %996 = vmatpush2.msra.mxu0 0.0
    %997 = vmatprep.subr.mxu0 0.0
    %998 = vmatpush2.msra.mxu0 0.0
    %999 = vmatprep.subr.mxu0 0.0
    %1000 = vmatpush2.msra.mxu0 0.0
    %1001 = vmatprep.mubr.f32.mxu0 0.0
    %1002 = vmatmul.mubr.f32.gmra.mxu0 %v935
    %v1003 = vpop.f32.mrf.mxu0
    %v1004 = vadd.f32 0.0, %v1003
    %v1005 = vpop.f32.mrf.mxu0
    %1006 = vdwg.mxu0
    %1007 = vrot.lane.b32.xlu0 %v136, 48
    %v1008 = vpop.permute.xlu0 %1007
    %v1011 = vsel %vm147, %v849, 0
    %1013 = vmatprep.subr.mxu0 0.0
    %1014 = vmatpush1.msra.mxu0 0.0
    %1015 = vmatprep.subr.mxu0 0.0
    %1016 = vmatpush1.msra.mxu0 0.0
    %1017 = vmatprep.subr.mxu0 0.0
    %1018 = vmatpush1.msra.mxu0 0.0
    %1019 = vmatprep.subr.mxu0 0.0
    %1020 = vmatpush1.msra.mxu0 0.0
    %1021 = vmatprep.subr.mxu0 0.0
    %1022 = vmatpush1.msra.mxu0 0.0
    %1023 = vmatprep.subr.mxu0 0.0
    %1024 = vmatpush1.msra.mxu0 0.0
    %1025 = vmatprep.subr.mxu0 0.0
    %1026 = vmatpush1.msra.mxu0 0.0
    %1027 = vmatprep.subr.mxu0 0.0
    %1028 = vmatpush1.msra.mxu0 0.0
    %1029 = vmatprep.subr.mxu0 0.0
    %1030 = vmatpush1.msra.mxu0 0.0
    %1031 = vmatprep.subr.mxu0 0.0
    %1032 = vmatpush1.msra.mxu0 0.0
    %1033 = vmatprep.subr.mxu0 0.0
    %1034 = vmatpush1.msra.mxu0 0.0
    %1035 = vmatprep.subr.mxu0 0.0
    %1036 = vmatpush1.msra.mxu0 0.0
    %1037 = vmatprep.subr.mxu0 0.0
    %1038 = vmatpush1.msra.mxu0 0.0
    %1039 = vmatprep.subr.mxu0 0.0
    %1040 = vmatpush1.msra.mxu0 0.0
    %1041 = vmatprep.subr.mxu0 0.0
    %1042 = vmatpush1.msra.mxu0 0.0
    %1043 = vmatprep.subr.mxu0 0.0
    %1044 = vmatpush1.msra.mxu0 %v1008
    %1045 = vmatprep.subr.mxu0 0.0
    %1046 = vmatpush2.msra.mxu0 0.0
    %1047 = vmatprep.subr.mxu0 0.0
    %1048 = vmatpush2.msra.mxu0 0.0
    %1049 = vmatprep.subr.mxu0 0.0
    %1050 = vmatpush2.msra.mxu0 0.0
    %1051 = vmatprep.subr.mxu0 0.0
    %1052 = vmatpush2.msra.mxu0 0.0
    %1053 = vmatprep.subr.mxu0 0.0
    %1054 = vmatpush2.msra.mxu0 0.0
    %1055 = vmatprep.subr.mxu0 0.0
    %1056 = vmatpush2.msra.mxu0 0.0
    %1057 = vmatprep.subr.mxu0 0.0
    %1058 = vmatpush2.msra.mxu0 0.0
    %1059 = vmatprep.subr.mxu0 0.0
    %1060 = vmatpush2.msra.mxu0 0.0
    %1061 = vmatprep.subr.mxu0 0.0
    %1062 = vmatpush2.msra.mxu0 0.0
    %1063 = vmatprep.subr.mxu0 0.0
    %1064 = vmatpush2.msra.mxu0 0.0
    %1065 = vmatprep.subr.mxu0 0.0
    %1066 = vmatpush2.msra.mxu0 0.0
    %1067 = vmatprep.subr.mxu0 0.0
    %1068 = vmatpush2.msra.mxu0 0.0
    %1069 = vmatprep.subr.mxu0 0.0
    %1070 = vmatpush2.msra.mxu0 0.0
    %1071 = vmatprep.subr.mxu0 0.0
    %1072 = vmatpush2.msra.mxu0 0.0
    %1073 = vmatprep.subr.mxu0 0.0
    %1074 = vmatpush2.msra.mxu0 0.0
    %1075 = vmatprep.subr.mxu0 0.0
    %1076 = vmatpush2.msra.mxu0 0.0
    %1077 = vmatprep.mubr.f32.mxu0 0.0
    %1078 = vmatmul.mubr.f32.gmra.mxu0 %v1011
    %v1079 = vpop.f32.mrf.mxu0
    %v1080 = vadd.f32 0.0, %v1079
    %v1081 = vpop.f32.mrf.mxu0
    %1082 = vdwg.mxu0
    %1083 = vrot.lane.b32.xlu0 %v136, 40
    %v1084 = vpop.permute.xlu0 %1083
    %v1087 = vsel %vm147, %v850, 0
    %1089 = vmatprep.subr.mxu0 0.0
    %1090 = vmatpush1.msra.mxu0 0.0
    %1091 = vmatprep.subr.mxu0 0.0
    %1092 = vmatpush1.msra.mxu0 0.0
    %1093 = vmatprep.subr.mxu0 0.0
    %1094 = vmatpush1.msra.mxu0 0.0
    %1095 = vmatprep.subr.mxu0 0.0
    %1096 = vmatpush1.msra.mxu0 0.0
    %1097 = vmatprep.subr.mxu0 0.0
    %1098 = vmatpush1.msra.mxu0 0.0
    %1099 = vmatprep.subr.mxu0 0.0
    %1100 = vmatpush1.msra.mxu0 0.0
    %1101 = vmatprep.subr.mxu0 0.0
    %1102 = vmatpush1.msra.mxu0 0.0
    %1103 = vmatprep.subr.mxu0 0.0
    %1104 = vmatpush1.msra.mxu0 0.0
    %1105 = vmatprep.subr.mxu0 0.0
    %1106 = vmatpush1.msra.mxu0 0.0
    %1107 = vmatprep.subr.mxu0 0.0
    %1108 = vmatpush1.msra.mxu0 0.0
    %1109 = vmatprep.subr.mxu0 0.0
    %1110 = vmatpush1.msra.mxu0 0.0
    %1111 = vmatprep.subr.mxu0 0.0
    %1112 = vmatpush1.msra.mxu0 0.0
    %1113 = vmatprep.subr.mxu0 0.0
    %1114 = vmatpush1.msra.mxu0 0.0
    %1115 = vmatprep.subr.mxu0 0.0
    %1116 = vmatpush1.msra.mxu0 0.0
    %1117 = vmatprep.subr.mxu0 0.0
    %1118 = vmatpush1.msra.mxu0 0.0
    %1119 = vmatprep.subr.mxu0 0.0
    %1120 = vmatpush1.msra.mxu0 %v1084
    %1121 = vmatprep.subr.mxu0 0.0
    %1122 = vmatpush2.msra.mxu0 0.0
    %1123 = vmatprep.subr.mxu0 0.0
    %1124 = vmatpush2.msra.mxu0 0.0
    %1125 = vmatprep.subr.mxu0 0.0
    %1126 = vmatpush2.msra.mxu0 0.0
    %1127 = vmatprep.subr.mxu0 0.0
    %1128 = vmatpush2.msra.mxu0 0.0
    %1129 = vmatprep.subr.mxu0 0.0
    %1130 = vmatpush2.msra.mxu0 0.0
    %1131 = vmatprep.subr.mxu0 0.0
    %1132 = vmatpush2.msra.mxu0 0.0
    %1133 = vmatprep.subr.mxu0 0.0
    %1134 = vmatpush2.msra.mxu0 0.0
    %1135 = vmatprep.subr.mxu0 0.0
    %1136 = vmatpush2.msra.mxu0 0.0
    %1137 = vmatprep.subr.mxu0 0.0
    %1138 = vmatpush2.msra.mxu0 0.0
    %1139 = vmatprep.subr.mxu0 0.0
    %1140 = vmatpush2.msra.mxu0 0.0
    %1141 = vmatprep.subr.mxu0 0.0
    %1142 = vmatpush2.msra.mxu0 0.0
    %1143 = vmatprep.subr.mxu0 0.0
    %1144 = vmatpush2.msra.mxu0 0.0
    %1145 = vmatprep.subr.mxu0 0.0
    %1146 = vmatpush2.msra.mxu0 0.0
    %1147 = vmatprep.subr.mxu0 0.0
    %1148 = vmatpush2.msra.mxu0 0.0
    %1149 = vmatprep.subr.mxu0 0.0
    %1150 = vmatpush2.msra.mxu0 0.0
    %1151 = vmatprep.subr.mxu0 0.0
    %1152 = vmatpush2.msra.mxu0 0.0
    %1153 = vmatprep.mubr.f32.mxu0 0.0
    %1154 = vmatmul.mubr.f32.gmra.mxu0 %v1087
    %v1155 = vpop.f32.mrf.mxu0
    %v1156 = vadd.f32 0.0, %v1155
    %v1157 = vpop.f32.mrf.mxu0
    %1158 = vdwg.mxu0
    %1160 = vrot.lane.b32.xlu0 %v1004, 8
    %v1161 = vpop.permute.xlu0 %1160
    %1164 = vrot.lane.b32.xlu0 %v1080, 16
    %v1165 = vpop.permute.xlu0 %1164
    %1168 = vrot.lane.b32.xlu0 %v1156, 24
    %v1169 = vpop.permute.xlu0 %1168
    %v1171 = vsel %vm147, %v928, %v1161
    %vm1172 = vcmask 130048
    %v1173 = vsel %vm1172, %v1171, %v1165
    %vm1174 = vcmask 195584
    %v1175 = vsel %vm1174, %v1173, %v1169
    %1176 = vrot.lane.b32.xlu0 %v141, 64
    %v1177 = vpop.permute.xlu0 %1176
    %v1180 = vsel %vm147, %v851, 0
    %1182 = vmatprep.subr.mxu0 0.0
    %1183 = vmatpush1.msra.mxu0 0.0
    %1184 = vmatprep.subr.mxu0 0.0
    %1185 = vmatpush1.msra.mxu0 0.0
    %1186 = vmatprep.subr.mxu0 0.0
    %1187 = vmatpush1.msra.mxu0 0.0
    %1188 = vmatprep.subr.mxu0 0.0
    %1189 = vmatpush1.msra.mxu0 0.0
    %1190 = vmatprep.subr.mxu0 0.0
    %1191 = vmatpush1.msra.mxu0 0.0
    %1192 = vmatprep.subr.mxu0 0.0
    %1193 = vmatpush1.msra.mxu0 0.0
    %1194 = vmatprep.subr.mxu0 0.0
    %1195 = vmatpush1.msra.mxu0 0.0
    %1196 = vmatprep.subr.mxu0 0.0
    %1197 = vmatpush1.msra.mxu0 0.0
    %1198 = vmatprep.subr.mxu0 0.0
    %1199 = vmatpush1.msra.mxu0 0.0
    %1200 = vmatprep.subr.mxu0 0.0
    %1201 = vmatpush1.msra.mxu0 0.0
    %1202 = vmatprep.subr.mxu0 0.0
    %1203 = vmatpush1.msra.mxu0 0.0
    %1204 = vmatprep.subr.mxu0 0.0
    %1205 = vmatpush1.msra.mxu0 0.0
    %1206 = vmatprep.subr.mxu0 0.0
    %1207 = vmatpush1.msra.mxu0 0.0
    %1208 = vmatprep.subr.mxu0 0.0
    %1209 = vmatpush1.msra.mxu0 0.0
    %1210 = vmatprep.subr.mxu0 0.0
    %1211 = vmatpush1.msra.mxu0 0.0
    %1212 = vmatprep.subr.mxu0 0.0
    %1213 = vmatpush1.msra.mxu0 %v1177
    %1214 = vmatprep.subr.mxu0 0.0
    %1215 = vmatpush2.msra.mxu0 0.0
    %1216 = vmatprep.subr.mxu0 0.0
    %1217 = vmatpush2.msra.mxu0 0.0
    %1218 = vmatprep.subr.mxu0 0.0
    %1219 = vmatpush2.msra.mxu0 0.0
    %1220 = vmatprep.subr.mxu0 0.0
    %1221 = vmatpush2.msra.mxu0 0.0
    %1222 = vmatprep.subr.mxu0 0.0
    %1223 = vmatpush2.msra.mxu0 0.0
    %1224 = vmatprep.subr.mxu0 0.0
    %1225 = vmatpush2.msra.mxu0 0.0
    %1226 = vmatprep.subr.mxu0 0.0
    %1227 = vmatpush2.msra.mxu0 0.0
    %1228 = vmatprep.subr.mxu0 0.0
    %1229 = vmatpush2.msra.mxu0 0.0
    %1230 = vmatprep.subr.mxu0 0.0
    %1231 = vmatpush2.msra.mxu0 0.0
    %1232 = vmatprep.subr.mxu0 0.0
    %1233 = vmatpush2.msra.mxu0 0.0
    %1234 = vmatprep.subr.mxu0 0.0
    %1235 = vmatpush2.msra.mxu0 0.0
    %1236 = vmatprep.subr.mxu0 0.0
    %1237 = vmatpush2.msra.mxu0 0.0
    %1238 = vmatprep.subr.mxu0 0.0
    %1239 = vmatpush2.msra.mxu0 0.0
    %1240 = vmatprep.subr.mxu0 0.0
    %1241 = vmatpush2.msra.mxu0 0.0
    %1242 = vmatprep.subr.mxu0 0.0
    %1243 = vmatpush2.msra.mxu0 0.0
    %1244 = vmatprep.subr.mxu0 0.0
    %1245 = vmatpush2.msra.mxu0 0.0
    %1246 = vmatprep.mubr.f32.mxu0 0.0
    %1247 = vmatmul.mubr.f32.gmra.mxu0 %v1180
    %v1248 = vpop.f32.mrf.mxu0
    %v1249 = vadd.f32 0.0, %v1248
    %v1250 = vpop.f32.mrf.mxu0
    %1251 = vdwg.mxu0
    %1252 = vrot.lane.b32.xlu0 %v141, 56
    %v1253 = vpop.permute.xlu0 %1252
    %v1256 = vsel %vm147, %v852, 0
    %1258 = vmatprep.subr.mxu0 0.0
    %1259 = vmatpush1.msra.mxu0 0.0
    %1260 = vmatprep.subr.mxu0 0.0
    %1261 = vmatpush1.msra.mxu0 0.0
    %1262 = vmatprep.subr.mxu0 0.0
    %1263 = vmatpush1.msra.mxu0 0.0
    %1264 = vmatprep.subr.mxu0 0.0
    %1265 = vmatpush1.msra.mxu0 0.0
    %1266 = vmatprep.subr.mxu0 0.0
    %1267 = vmatpush1.msra.mxu0 0.0
    %1268 = vmatprep.subr.mxu0 0.0
    %1269 = vmatpush1.msra.mxu0 0.0
    %1270 = vmatprep.subr.mxu0 0.0
    %1271 = vmatpush1.msra.mxu0 0.0
    %1272 = vmatprep.subr.mxu0 0.0
    %1273 = vmatpush1.msra.mxu0 0.0
    %1274 = vmatprep.subr.mxu0 0.0
    %1275 = vmatpush1.msra.mxu0 0.0
    %1276 = vmatprep.subr.mxu0 0.0
    %1277 = vmatpush1.msra.mxu0 0.0
    %1278 = vmatprep.subr.mxu0 0.0
    %1279 = vmatpush1.msra.mxu0 0.0
    %1280 = vmatprep.subr.mxu0 0.0
    %1281 = vmatpush1.msra.mxu0 0.0
    %1282 = vmatprep.subr.mxu0 0.0
    %1283 = vmatpush1.msra.mxu0 0.0
    %1284 = vmatprep.subr.mxu0 0.0
    %1285 = vmatpush1.msra.mxu0 0.0
    %1286 = vmatprep.subr.mxu0 0.0
    %1287 = vmatpush1.msra.mxu0 0.0
    %1288 = vmatprep.subr.mxu0 0.0
    %1289 = vmatpush1.msra.mxu0 %v1253
    %1290 = vmatprep.subr.mxu0 0.0
    %1291 = vmatpush2.msra.mxu0 0.0
    %1292 = vmatprep.subr.mxu0 0.0
    %1293 = vmatpush2.msra.mxu0 0.0
    %1294 = vmatprep.subr.mxu0 0.0
    %1295 = vmatpush2.msra.mxu0 0.0
    %1296 = vmatprep.subr.mxu0 0.0
    %1297 = vmatpush2.msra.mxu0 0.0
    %1298 = vmatprep.subr.mxu0 0.0
    %1299 = vmatpush2.msra.mxu0 0.0
    %1300 = vmatprep.subr.mxu0 0.0
    %1301 = vmatpush2.msra.mxu0 0.0
    %1302 = vmatprep.subr.mxu0 0.0
    %1303 = vmatpush2.msra.mxu0 0.0
    %1304 = vmatprep.subr.mxu0 0.0
    %1305 = vmatpush2.msra.mxu0 0.0
    %1306 = vmatprep.subr.mxu0 0.0
    %1307 = vmatpush2.msra.mxu0 0.0
    %1308 = vmatprep.subr.mxu0 0.0
    %1309 = vmatpush2.msra.mxu0 0.0
    %1310 = vmatprep.subr.mxu0 0.0
    %1311 = vmatpush2.msra.mxu0 0.0
    %1312 = vmatprep.subr.mxu0 0.0
    %1313 = vmatpush2.msra.mxu0 0.0
    %1314 = vmatprep.subr.mxu0 0.0
    %1315 = vmatpush2.msra.mxu0 0.0
    %1316 = vmatprep.subr.mxu0 0.0
    %1317 = vmatpush2.msra.mxu0 0.0
    %1318 = vmatprep.subr.mxu0 0.0
    %1319 = vmatpush2.msra.mxu0 0.0
    %1320 = vmatprep.subr.mxu0 0.0
    %1321 = vmatpush2.msra.mxu0 0.0
    %1322 = vmatprep.mubr.f32.mxu0 0.0
    %1323 = vmatmul.mubr.f32.gmra.mxu0 %v1256
    %v1324 = vpop.f32.mrf.mxu0
    %v1325 = vadd.f32 0.0, %v1324
    %v1326 = vpop.f32.mrf.mxu0
    %1327 = vdwg.mxu0
    %1328 = vrot.lane.b32.xlu0 %v141, 48
    %v1329 = vpop.permute.xlu0 %1328
    %v1332 = vsel %vm147, %v853, 0
    %1334 = vmatprep.subr.mxu0 0.0
    %1335 = vmatpush1.msra.mxu0 0.0
    %1336 = vmatprep.subr.mxu0 0.0
    %1337 = vmatpush1.msra.mxu0 0.0
    %1338 = vmatprep.subr.mxu0 0.0
    %1339 = vmatpush1.msra.mxu0 0.0
    %1340 = vmatprep.subr.mxu0 0.0
    %1341 = vmatpush1.msra.mxu0 0.0
    %1342 = vmatprep.subr.mxu0 0.0
    %1343 = vmatpush1.msra.mxu0 0.0
    %1344 = vmatprep.subr.mxu0 0.0
    %1345 = vmatpush1.msra.mxu0 0.0
    %1346 = vmatprep.subr.mxu0 0.0
    %1347 = vmatpush1.msra.mxu0 0.0
    %1348 = vmatprep.subr.mxu0 0.0
    %1349 = vmatpush1.msra.mxu0 0.0
    %1350 = vmatprep.subr.mxu0 0.0
    %1351 = vmatpush1.msra.mxu0 0.0
    %1352 = vmatprep.subr.mxu0 0.0
    %1353 = vmatpush1.msra.mxu0 0.0
    %1354 = vmatprep.subr.mxu0 0.0
    %1355 = vmatpush1.msra.mxu0 0.0
    %1356 = vmatprep.subr.mxu0 0.0
    %1357 = vmatpush1.msra.mxu0 0.0
    %1358 = vmatprep.subr.mxu0 0.0
    %1359 = vmatpush1.msra.mxu0 0.0
    %1360 = vmatprep.subr.mxu0 0.0
    %1361 = vmatpush1.msra.mxu0 0.0
    %1362 = vmatprep.subr.mxu0 0.0
    %1363 = vmatpush1.msra.mxu0 0.0
    %1364 = vmatprep.subr.mxu0 0.0
    %1365 = vmatpush1.msra.mxu0 %v1329
    %1366 = vmatprep.subr.mxu0 0.0
    %1367 = vmatpush2.msra.mxu0 0.0
    %1368 = vmatprep.subr.mxu0 0.0
    %1369 = vmatpush2.msra.mxu0 0.0
    %1370 = vmatprep.subr.mxu0 0.0
    %1371 = vmatpush2.msra.mxu0 0.0
    %1372 = vmatprep.subr.mxu0 0.0
    %1373 = vmatpush2.msra.mxu0 0.0
    %1374 = vmatprep.subr.mxu0 0.0
    %1375 = vmatpush2.msra.mxu0 0.0
    %1376 = vmatprep.subr.mxu0 0.0
    %1377 = vmatpush2.msra.mxu0 0.0
    %1378 = vmatprep.subr.mxu0 0.0
    %1379 = vmatpush2.msra.mxu0 0.0
    %1380 = vmatprep.subr.mxu0 0.0
    %1381 = vmatpush2.msra.mxu0 0.0
    %1382 = vmatprep.subr.mxu0 0.0
    %1383 = vmatpush2.msra.mxu0 0.0
    %1384 = vmatprep.subr.mxu0 0.0
    %1385 = vmatpush2.msra.mxu0 0.0
    %1386 = vmatprep.subr.mxu0 0.0
    %1387 = vmatpush2.msra.mxu0 0.0
    %1388 = vmatprep.subr.mxu0 0.0
    %1389 = vmatpush2.msra.mxu0 0.0
    %1390 = vmatprep.subr.mxu0 0.0
    %1391 = vmatpush2.msra.mxu0 0.0
    %1392 = vmatprep.subr.mxu0 0.0
    %1393 = vmatpush2.msra.mxu0 0.0
    %1394 = vmatprep.subr.mxu0 0.0
    %1395 = vmatpush2.msra.mxu0 0.0
    %1396 = vmatprep.subr.mxu0 0.0
    %1397 = vmatpush2.msra.mxu0 0.0
    %1398 = vmatprep.mubr.f32.mxu0 0.0
    %1399 = vmatmul.mubr.f32.gmra.mxu0 %v1332
    %v1400 = vpop.f32.mrf.mxu0
    %v1401 = vadd.f32 0.0, %v1400
    %v1402 = vpop.f32.mrf.mxu0
    %1403 = vdwg.mxu0
    %1404 = vrot.lane.b32.xlu0 %v141, 40
    %v1405 = vpop.permute.xlu0 %1404
    %v1408 = vsel %vm147, %v854, 0
    %1410 = vmatprep.subr.mxu0 0.0
    %1411 = vmatpush1.msra.mxu0 0.0
    %1412 = vmatprep.subr.mxu0 0.0
    %1413 = vmatpush1.msra.mxu0 0.0
    %1414 = vmatprep.subr.mxu0 0.0
    %1415 = vmatpush1.msra.mxu0 0.0
    %1416 = vmatprep.subr.mxu0 0.0
    %1417 = vmatpush1.msra.mxu0 0.0
    %1418 = vmatprep.subr.mxu0 0.0
    %1419 = vmatpush1.msra.mxu0 0.0
    %1420 = vmatprep.subr.mxu0 0.0
    %1421 = vmatpush1.msra.mxu0 0.0
    %1422 = vmatprep.subr.mxu0 0.0
    %1423 = vmatpush1.msra.mxu0 0.0
    %1424 = vmatprep.subr.mxu0 0.0
    %1425 = vmatpush1.msra.mxu0 0.0
    %1426 = vmatprep.subr.mxu0 0.0
    %1427 = vmatpush1.msra.mxu0 0.0
    %1428 = vmatprep.subr.mxu0 0.0
    %1429 = vmatpush1.msra.mxu0 0.0
    %1430 = vmatprep.subr.mxu0 0.0
    %1431 = vmatpush1.msra.mxu0 0.0
    %1432 = vmatprep.subr.mxu0 0.0
    %1433 = vmatpush1.msra.mxu0 0.0
    %1434 = vmatprep.subr.mxu0 0.0
    %1435 = vmatpush1.msra.mxu0 0.0
    %1436 = vmatprep.subr.mxu0 0.0
    %1437 = vmatpush1.msra.mxu0 0.0
    %1438 = vmatprep.subr.mxu0 0.0
    %1439 = vmatpush1.msra.mxu0 0.0
    %1440 = vmatprep.subr.mxu0 0.0
    %1441 = vmatpush1.msra.mxu0 %v1405
    %1442 = vmatprep.subr.mxu0 0.0
    %1443 = vmatpush2.msra.mxu0 0.0
    %1444 = vmatprep.subr.mxu0 0.0
    %1445 = vmatpush2.msra.mxu0 0.0
    %1446 = vmatprep.subr.mxu0 0.0
    %1447 = vmatpush2.msra.mxu0 0.0
    %1448 = vmatprep.subr.mxu0 0.0
    %1449 = vmatpush2.msra.mxu0 0.0
    %1450 = vmatprep.subr.mxu0 0.0
    %1451 = vmatpush2.msra.mxu0 0.0
    %1452 = vmatprep.subr.mxu0 0.0
    %1453 = vmatpush2.msra.mxu0 0.0
    %1454 = vmatprep.subr.mxu0 0.0
    %1455 = vmatpush2.msra.mxu0 0.0
    %1456 = vmatprep.subr.mxu0 0.0
    %1457 = vmatpush2.msra.mxu0 0.0
    %1458 = vmatprep.subr.mxu0 0.0
    %1459 = vmatpush2.msra.mxu0 0.0
    %1460 = vmatprep.subr.mxu0 0.0
    %1461 = vmatpush2.msra.mxu0 0.0
    %1462 = vmatprep.subr.mxu0 0.0
    %1463 = vmatpush2.msra.mxu0 0.0
    %1464 = vmatprep.subr.mxu0 0.0
    %1465 = vmatpush2.msra.mxu0 0.0
    %1466 = vmatprep.subr.mxu0 0.0
    %1467 = vmatpush2.msra.mxu0 0.0
    %1468 = vmatprep.subr.mxu0 0.0
    %1469 = vmatpush2.msra.mxu0 0.0
    %1470 = vmatprep.subr.mxu0 0.0
    %1471 = vmatpush2.msra.mxu0 0.0
    %1472 = vmatprep.subr.mxu0 0.0
    %1473 = vmatpush2.msra.mxu0 0.0
    %1474 = vmatprep.mubr.f32.mxu0 0.0
    %1475 = vmatmul.mubr.f32.gmra.mxu0 %v1408
    %v1476 = vpop.f32.mrf.mxu0
    %v1477 = vadd.f32 0.0, %v1476
    %v1478 = vpop.f32.mrf.mxu0
    %1479 = vdwg.mxu0
    %1481 = vrot.lane.b32.xlu0 %v1325, 8
    %v1482 = vpop.permute.xlu0 %1481
    %1485 = vrot.lane.b32.xlu0 %v1401, 16
    %v1486 = vpop.permute.xlu0 %1485
    %1489 = vrot.lane.b32.xlu0 %v1477, 24
    %v1490 = vpop.permute.xlu0 %1489
    %v1492 = vsel %vm147, %v1249, %v1482
    %v1493 = vsel %vm1172, %v1492, %v1486
    %v1494 = vsel %vm1174, %v1493, %v1490
    %v1495 = vld [vmem:[#allocation7] sm:$0xff]
    %v1496 = vld [vmem:[#allocation7 + $0x8] sm:$0xff]
    %v1497 = vld [vmem:[#allocation7 + $0x10] sm:$0xff]
    %v1498 = vld [vmem:[#allocation7 + $0x18] sm:$0xff]
    %v1500 = vsel %vm62, %v1175, 0
    %v1503 = vsel %vm62, %v1494, 0
    %1505 = vmatprep.subr.mxu0 0.0
    %1506 = vmatpush1.msra.mxu0 0.0
    %1507 = vmatprep.subr.mxu0 0.0
    %1508 = vmatpush1.msra.mxu0 0.0
    %1509 = vmatprep.subr.mxu0 0.0
    %1510 = vmatpush1.msra.mxu0 0.0
    %1511 = vmatprep.subr.mxu0 0.0
    %1512 = vmatpush1.msra.mxu0 0.0
    %1513 = vmatprep.subr.mxu0 0.0
    %1514 = vmatpush1.msra.mxu0 0.0
    %1515 = vmatprep.subr.mxu0 0.0
    %1516 = vmatpush1.msra.mxu0 0.0
    %1517 = vmatprep.subr.mxu0 0.0
    %1518 = vmatpush1.msra.mxu0 0.0
    %1519 = vmatprep.subr.mxu0 0.0
    %1520 = vmatpush1.msra.mxu0 0.0
    %1521 = vmatprep.subr.mxu0 0.0
    %1522 = vmatpush1.msra.mxu0 0.0
    %1523 = vmatprep.subr.mxu0 0.0
    %1524 = vmatpush1.msra.mxu0 0.0
    %1525 = vmatprep.subr.mxu0 0.0
    %1526 = vmatpush1.msra.mxu0 0.0
    %1527 = vmatprep.subr.mxu0 0.0
    %1528 = vmatpush1.msra.mxu0 0.0
    %1529 = vmatprep.subr.mxu0 0.0
    %1530 = vmatpush1.msra.mxu0 %v1498
    %1531 = vmatprep.subr.mxu0 0.0
    %1532 = vmatpush1.msra.mxu0 %v1497
    %1533 = vmatprep.subr.mxu0 0.0
    %1534 = vmatpush1.msra.mxu0 %v1496
    %1535 = vmatprep.subr.mxu0 0.0
    %1536 = vmatpush1.msra.mxu0 %v1495
    %1537 = vmatprep.subr.mxu0 0.0
    %1538 = vmatpush2.msra.mxu0 0.0
    %1539 = vmatprep.subr.mxu0 0.0
    %1540 = vmatpush2.msra.mxu0 0.0
    %1541 = vmatprep.subr.mxu0 0.0
    %1542 = vmatpush2.msra.mxu0 0.0
    %1543 = vmatprep.subr.mxu0 0.0
    %1544 = vmatpush2.msra.mxu0 0.0
    %1545 = vmatprep.subr.mxu0 0.0
    %1546 = vmatpush2.msra.mxu0 0.0
    %1547 = vmatprep.subr.mxu0 0.0
    %1548 = vmatpush2.msra.mxu0 0.0
    %1549 = vmatprep.subr.mxu0 0.0
    %1550 = vmatpush2.msra.mxu0 0.0
    %1551 = vmatprep.subr.mxu0 0.0
    %1552 = vmatpush2.msra.mxu0 0.0
    %1553 = vmatprep.subr.mxu0 0.0
    %1554 = vmatpush2.msra.mxu0 0.0
    %1555 = vmatprep.subr.mxu0 0.0
    %1556 = vmatpush2.msra.mxu0 0.0
    %1557 = vmatprep.subr.mxu0 0.0
    %1558 = vmatpush2.msra.mxu0 0.0
    %1559 = vmatprep.subr.mxu0 0.0
    %1560 = vmatpush2.msra.mxu0 0.0
    %1561 = vmatprep.subr.mxu0 0.0
    %1562 = vmatpush2.msra.mxu0 0.0
    %1563 = vmatprep.subr.mxu0 0.0
    %1564 = vmatpush2.msra.mxu0 0.0
    %1565 = vmatprep.subr.mxu0 0.0
    %1566 = vmatpush2.msra.mxu0 0.0
    %1567 = vmatprep.subr.mxu0 0.0
    %1568 = vmatpush2.msra.mxu0 0.0
    %1569 = vmatprep.mubr.f32.mxu0 0.0
    %1570 = vmatmul.mubr.f32.gmra.mxu0 %v1500
    %v1571 = vpop.f32.mrf.mxu0
    %v1572 = vadd.f32 0.0, %v1571
    %v1573 = vpop.f32.mrf.mxu0
    %1574 = vmatprep.mubr.f32.mxu0 0.0
    %1575 = vmatmul.mubr.f32.gmra.mxu0 %v1503
    %v1576 = vpop.f32.mrf.mxu0
    %v1577 = vadd.f32 0.0, %v1576
    %v1578 = vpop.f32.mrf.mxu0
    %1579 = vdwg.mxu0
    %1580 = vst.msk [vmem:[#allocation8] sm:$0xff] %vm62, %v1572
    %1581 = vst.msk [vmem:[#allocation8 + $0x8] sm:$0xff] %vm62, %v1577
    // Predicated region
    $region26: #{tpu_custom_call.1} parent=1 // pred_check
      _
    $region27: #{tpu_custom_call.1} parent=1 // pred_check_branch
      %1583 = sbr.rel (0) target = $region29
    $region28: #{tpu_custom_call.1} parent=1 // pred_region
      %s1585 = ssub.s32 256, 256
      %1586 = vsyncadd [#allocation4], %s1585
      %s1587 = sshll.u32 [#allocation8], 4
      %s1588 = int_to_ptr.vmem [resolvable:$true] %s1587
      %1593 = dma.vmem_to_hbm [thread:$0]  %s1588, 256, %s3, [#allocation4], 128, 128, 8
    $region29: #{tpu_custom_call.1} parent=1 // pred_fallthru
      _
    // Predicated region
    $region30: #{tpu_custom_call.1} parent=1 // pred_check
      _
    $region31: #{tpu_custom_call.1} parent=1 // pred_check_branch
      %1595 = sbr.rel (0) target = $region33
    $region32: #{tpu_custom_call.1} parent=1 // pred_region
      %1596 = dma.done [#allocation4], 256
    $region33: #{tpu_custom_call.1} parent=1 // pred_fallthru
      _
    %1597 = vsyncpa [#allocation3], 1
    %1598 = vsyncpa [#allocation6], 1
    %1599 = vsyncpa [#allocation4], 1

</llo_original>
